<compile_context>
chip_gen: v7x
topology: tpu7x:2x2x1
jax: 0.10.0
libtpu: 0.0.40
codegen_flags: <defaults>
</compile_context>

<pallas_src>
import functools

import jax
import jax.numpy as jnp
from jax import lax
from jax.experimental import pallas as pl
from jax.experimental.pallas import tpu as pltpu

BN_EPS = 1e-5


# ------------------------------ fused kernel --------------------------------

def _down_fused_kernel(x_ref, w1_ref, scale1_ref, shift1_ref,
                       w2_ref, scale2_ref, shift2_ref, mask_ref,
                       o_ref, p1_ref, p2_ref,
                       *, batch, ph, pwd, cin, cmid, cout):
    """Fused maxpool + (conv3x3+BN+ReLU) x 2.

    x_ref:    (N, H/2, 2, W/2, 2*Cin)  -- pool corners exposed by a free reshape
    w1_ref:   (9, Cmid, Cin)   tap-major, transposed conv1 weights
    w2_ref:   (9, Cout, Cmid)  tap-major, transposed conv2 weights
    scale/shift: (C, 1) folded BatchNorm + bias
    mask_ref: (1, Q)  1.0 on valid flattened-padded positions, 0.0 elsewhere
    o_ref:    (Cout, Q)  channel-major "wide" output (wrapper crops padding)
    p1_ref:   (Q + 2*Wp + 2, Cin)   zero-padded flat pooled image (row-major)
    p2_ref:   (Cmid, Q + 2*Wp + 2)  zero-padded flat conv1 output (channel-major)
    """
    wp = pwd + 2                 # padded width
    hp = ph + 2                  # padded height
    l_img = hp * wp              # flat length of one padded image
    q_tot = batch * l_img        # compute / output width

    # ---------------- stage 1: 2x2 max pool (single input stream) -----------
    x5 = x_ref[...]                                        # (N, ph, 2, pwd, 2C)
    vmax = jnp.maximum(x5[:, :, 0, :, :], x5[:, :, 1, :, :])   # (N, ph, pwd, 2C)
    pooled = jnp.maximum(vmax[..., :cin], vmax[..., cin:])     # (N, ph, pwd, C)

    # Scatter pooled rows into the zero-padded flat buffer (interior only).
    p1_ref[...] = jnp.zeros(p1_ref.shape, p1_ref.dtype)
    for img in range(batch):
        for i in range(ph):
            dst = img * l_img + (i + 1) * wp + 1
            p1_ref[dst:dst + pwd, :] = pooled[img, i]          # (pwd, Cin)

    # ---------------- stage 2: conv1 (3x3, pad=1) + BN + ReLU ---------------
    # 9 shifted contiguous slices of the flat padded image; accumulate
    # channel-major on the MXU:  acc1[m, q] = sum_c W1t[t,m,c] * P1[s_t+q, c].
    acc1 = None
    for t in range(9):
        dh, dw = t // 3, t % 3
        s = dh * wp + dw
        a_tap = p1_ref[s:s + q_tot, :]                         # (Q, Cin)
        w_tap = w1_ref[t]                                      # (Cmid, Cin)
        d = lax.dot_general(w_tap, a_tap, (((1,), (1,)), ((), ())),
                            preferred_element_type=jnp.float32)  # (Cmid, Q)
        acc1 = d if acc1 is None else acc1 + d

    a1 = jnp.maximum(acc1 * scale1_ref[...] + shift1_ref[...], 0.0)
    a1 = a1 * mask_ref[...]        # zero out padding / between-image columns

    # Place conv1 output into the next zero-padded flat buffer (channel-major).
    p2_ref[...] = jnp.zeros(p2_ref.shape, p2_ref.dtype)
    p2_ref[:, wp + 1: wp + 1 + q_tot] = a1

    # ---------------- stage 3: conv2 (3x3, pad=1) + BN + ReLU ---------------
    acc2 = None
    for t in range(9):
        dh, dw = t // 3, t % 3
        s = dh * wp + dw
        b_tap = p2_ref[:, s:s + q_tot]                         # (Cmid, Q)
        w_tap = w2_ref[t]                                      # (Cout, Cmid)
        d = jnp.dot(w_tap, b_tap, preferred_element_type=jnp.float32)
        acc2 = d if acc2 is None else acc2 + d                 # (Cout, Q)

    # Lane-dense epilogue + single lane-dense output store.
    o_ref[...] = jnp.maximum(acc2 * scale2_ref[...] + shift2_ref[...], 0.0)


# --------------------------------- wrapper ----------------------------------

def down_forward(x_nchw, params1, params2):
    """x_nchw: (N, Cin, H, W) with H, W even.  Returns (N, Cout, H/2, W/2)."""
    w1t, scale1, shift1 = params1
    w2t, scale2, shift2 = params2
    n, cin, h, w = x_nchw.shape
    ph, pwd = h // 2, w // 2          # pooled spatial size
    hp, wp = ph + 2, pwd + 2          # zero-padded spatial size
    l_img = hp * wp
    q_tot = n * l_img                 # flattened padded spatial (all images)
    lbuf = q_tot + 2 * wp + 2         # tap-slice overrun tail
    cmid = w1t.shape[1]
    cout = w2t.shape[1]

    # Layout glue only: NCHW -> NHWC, then a FREE row-major split exposing the
    # 2x2 pool corners.  (The transposes are tiny; absorbing them fully would
    # require in-kernel 4D transposes with worse lowering risk.)
    x5 = jnp.transpose(x_nchw, (0, 2, 3, 1)).reshape(n, ph, 2, pwd, 2 * cin)

    # Validity mask over the flattened padded coordinate q = n*L + i*Wp + j.
    q = jnp.arange(q_tot, dtype=jnp.int32)
    valid = ((q % wp) < pwd) & ((q % l_img) < ph * wp)
    mask = valid.astype(jnp.float32)[None, :]                  # (1, Q)

    kernel = functools.partial(_down_fused_kernel, batch=n, ph=ph, pwd=pwd,
                               cin=cin, cmid=cmid, cout=cout)

    out_wide = pl.pallas_call(
        kernel,
        grid=(1,),
        in_specs=[
            pl.BlockSpec((n, ph, 2, pwd, 2 * cin), lambda i: (0, 0, 0, 0, 0)),
            pl.BlockSpec((9, cmid, cin), lambda i: (0, 0, 0)),
            pl.BlockSpec((cmid, 1), lambda i: (0, 0)),
            pl.BlockSpec((cmid, 1), lambda i: (0, 0)),
            pl.BlockSpec((9, cout, cmid), lambda i: (0, 0, 0)),
            pl.BlockSpec((cout, 1), lambda i: (0, 0)),
            pl.BlockSpec((cout, 1), lambda i: (0, 0)),
            pl.BlockSpec((1, q_tot), lambda i: (0, 0)),
        ],
        out_specs=pl.BlockSpec((cout, q_tot), lambda i: (0, 0)),
        out_shape=jax.ShapeDtypeStruct((cout, q_tot), jnp.float32),
        scratch_shapes=[
            pltpu.VMEM((lbuf, cin), jnp.float32),    # padded flat pooled image
            pltpu.VMEM((cmid, lbuf), jnp.float32),   # padded flat conv1 output
        ],
        compiler_params=pltpu.CompilerParams(
            dimension_semantics=("arbitrary",)),
    )(x5, w1t, scale1, shift1, w2t, scale2, shift2, mask)

    # Crop the padding columns/rows and return NCHW.
    out = out_wide.reshape(cout, n, hp, wp)[:, :, :ph, :pwd]
    return jnp.transpose(out, (1, 0, 2, 3))


# ----------------------- parameter init & BN folding ------------------------

def init_conv_params(key, cin, cout):
    """PyTorch-style Conv2d init: weight (Cout, Cin, 3, 3), bias (Cout,)."""
    kw, kb = jax.random.split(key)
    fan_in = cin * 9
    bound = 1.0 / jnp.sqrt(jnp.float32(fan_in))
    wgt = jax.random.uniform(kw, (cout, cin, 3, 3), jnp.float32, -bound, bound)
    b = jax.random.uniform(kb, (cout,), jnp.float32, -bound, bound)
    return wgt, b


def fold_conv_bn(w_oihw, bias, gamma, beta, mean, var):
    """Return (w_tap (9, Cout, Cin), scale (Cout, 1), shift (Cout, 1))."""
    cout, cin, _, _ = w_oihw.shape
    w_tap = jnp.transpose(w_oihw, (2, 3, 0, 1)).reshape(9, cout, cin)
    bn_scale = gamma / jnp.sqrt(var + BN_EPS)
    shift = beta - mean * bn_scale + bias * bn_scale
    return w_tap, bn_scale[:, None], shift[:, None]


# ----------------------------- pure-JAX reference ----------------------------

def reference_down(x, w1, b1, w2, b2):
    x = lax.reduce_window(x, -jnp.inf, lax.max,
                          (1, 1, 2, 2), (1, 1, 2, 2), 'VALID')

    def conv_bn_relu(y, wgt, b):
        y = lax.conv_general_dilated(
            y, wgt, (1, 1), ((1, 1), (1, 1)),
            dimension_numbers=('NCHW', 'OIHW', 'NCHW'))
        scale = 1.0 / jnp.sqrt(1.0 + BN_EPS)          # default BN stats
        y = (y + b[None, :, None, None]) * scale
        return jnp.maximum(y, 0.0)

    x = conv_bn_relu(x, w1, b1)
    x = conv_bn_relu(x, w2, b2)
    return x


# ----------------------------------- main ------------------------------------

if __name__ == "__main__":
    key = jax.random.PRNGKey(0)
    k_x, k_c1, k_c2 = jax.random.split(key, 3)

    channel_in, channel_out = 4, 8
    N, H, W = 2, 16, 16
    x = jax.random.normal(k_x, (N, channel_in, H, W), jnp.float32)

    w1, b1 = init_conv_params(k_c1, channel_in, channel_out)
    w2, b2 = init_conv_params(k_c2, channel_out, channel_out)

    ones = jnp.ones((channel_out,), jnp.float32)
    zeros = jnp.zeros((channel_out,), jnp.float32)
    p1 = fold_conv_bn(w1, b1, ones, zeros, zeros, ones)
    p2 = fold_conv_bn(w2, b2, ones, zeros, zeros, ones)

    out = jax.jit(down_forward)(x, p1, p2)
    out = jax.block_until_ready(out)
    assert out.shape == (N, channel_out, H // 2, W // 2), out.shape

    ref = reference_down(x, w1, b1, w2, b2)
    assert jnp.allclose(out, ref, atol=1e-4, rtol=1e-4), \
        float(jnp.max(jnp.abs(out - ref)))

    print("KERNEL_OK")
</pallas_src>

<mosaic_0001>
module attributes {stable_mosaic.version = 11 : i64} {
  func.func @_down_fused_kernel(%arg0: i32, %arg1: memref<2x8x2x8x8xf32, #tpu.memory_space<vmem>>, %arg2: memref<9x8x4xf32, #tpu.memory_space<vmem>>, %arg3: memref<8x1xf32, #tpu.memory_space<vmem>>, %arg4: memref<8x1xf32, #tpu.memory_space<vmem>>, %arg5: memref<9x8x8xf32, #tpu.memory_space<vmem>>, %arg6: memref<8x1xf32, #tpu.memory_space<vmem>>, %arg7: memref<8x1xf32, #tpu.memory_space<vmem>>, %arg8: memref<1x200xf32, #tpu.memory_space<vmem>>, %arg9: memref<8x200xf32, #tpu.memory_space<vmem>>, %arg10: memref<222x4xf32, #tpu.memory_space<vmem>>, %arg11: memref<8x222xf32, #tpu.memory_space<vmem>>) attributes {dimension_semantics = [#tpu.dimension_semantics<arbitrary>], iteration_bounds = array<i64: 1>, scalar_prefetch = 0 : i64, scratch_operands = 2 : i64, tpu.core_type = #tpu.core_type<tc>, window_params = [{pipeline_mode = #tpu.pipeline_mode<synchronous>, transform_indices = @transform_0, window_bounds = array<i64: 2, 8, 2, 8, 8>}, {pipeline_mode = #tpu.pipeline_mode<synchronous>, transform_indices = @transform_1, window_bounds = array<i64: 9, 8, 4>}, {pipeline_mode = #tpu.pipeline_mode<synchronous>, transform_indices = @transform_2, window_bounds = array<i64: 8, 1>}, {pipeline_mode = #tpu.pipeline_mode<synchronous>, transform_indices = @transform_3, window_bounds = array<i64: 8, 1>}, {pipeline_mode = #tpu.pipeline_mode<synchronous>, transform_indices = @transform_4, window_bounds = array<i64: 9, 8, 8>}, {pipeline_mode = #tpu.pipeline_mode<synchronous>, transform_indices = @transform_5, window_bounds = array<i64: 8, 1>}, {pipeline_mode = #tpu.pipeline_mode<synchronous>, transform_indices = @transform_6, window_bounds = array<i64: 8, 1>}, {pipeline_mode = #tpu.pipeline_mode<synchronous>, transform_indices = @transform_7, window_bounds = array<i64: 1, 200>}, {pipeline_mode = #tpu.pipeline_mode<synchronous>, transform_indices = @transform_8, window_bounds = array<i64: 8, 200>}]} {
    %c0 = arith.constant 0 : index
    %c0_0 = arith.constant 0 : index
    %c0_1 = arith.constant 0 : index
    %c0_2 = arith.constant 0 : index
    %c0_3 = arith.constant 0 : index
    %0 = vector.load %arg1[%c0, %c0_0, %c0_1, %c0_2, %c0_3] : memref<2x8x2x8x8xf32, #tpu.memory_space<vmem>>, vector<2x8x2x8x8xf32>
    %1 = vector.extract_strided_slice %0 {offsets = [0, 0, 0, 0, 0], sizes = [2, 8, 1, 8, 8], strides = [1, 1, 1, 1, 1]} : vector<2x8x2x8x8xf32> to vector<2x8x1x8x8xf32>
    %2 = vector.shape_cast %1 : vector<2x8x1x8x8xf32> to vector<2x8x8x8xf32>
    %3 = vector.extract_strided_slice %0 {offsets = [0, 0, 1, 0, 0], sizes = [2, 8, 1, 8, 8], strides = [1, 1, 1, 1, 1]} : vector<2x8x2x8x8xf32> to vector<2x8x1x8x8xf32>
    %4 = vector.shape_cast %3 : vector<2x8x1x8x8xf32> to vector<2x8x8x8xf32>
    %5 = arith.maximumf %2, %4 : vector<2x8x8x8xf32>
    %6 = vector.extract_strided_slice %5 {offsets = [0, 0, 0, 0], sizes = [2, 8, 8, 4], strides = [1, 1, 1, 1]} : vector<2x8x8x8xf32> to vector<2x8x8x4xf32>
    %7 = vector.extract_strided_slice %5 {offsets = [0, 0, 0, 4], sizes = [2, 8, 8, 4], strides = [1, 1, 1, 1]} : vector<2x8x8x8xf32> to vector<2x8x8x4xf32>
    %8 = arith.maximumf %6, %7 : vector<2x8x8x4xf32>
    %cst = arith.constant 0.000000e+00 : f32
    %9 = vector.broadcast %cst : f32 to vector<222x4xf32>
    %c0_4 = arith.constant 0 : index
    %c0_5 = arith.constant 0 : index
    %10 = vector.load %arg10[%c0_4, %c0_5] : memref<222x4xf32, #tpu.memory_space<vmem>>, vector<222x4xf32>
    tpu.vector_store %arg10[%c0_4, %c0_5], %9 {strides = array<i32>} : memref<222x4xf32, #tpu.memory_space<vmem>>, vector<222x4xf32>,
    %11 = vector.extract_strided_slice %8 {offsets = [0, 0, 0, 0], sizes = [1, 1, 8, 4], strides = [1, 1, 1, 1]} : vector<2x8x8x4xf32> to vector<1x1x8x4xf32>
    %12 = vector.shape_cast %11 : vector<1x1x8x4xf32> to vector<8x4xf32>
    %c11 = arith.constant 11 : index
    %c0_6 = arith.constant 0 : index
    %13 = vector.load %arg10[%c11, %c0_6] : memref<222x4xf32, #tpu.memory_space<vmem>>, vector<8x4xf32>
    tpu.vector_store %arg10[%c11, %c0_6], %12 {strides = array<i32>} : memref<222x4xf32, #tpu.memory_space<vmem>>, vector<8x4xf32>,
    %14 = vector.extract_strided_slice %8 {offsets = [0, 1, 0, 0], sizes = [1, 1, 8, 4], strides = [1, 1, 1, 1]} : vector<2x8x8x4xf32> to vector<1x1x8x4xf32>
    %15 = vector.shape_cast %14 : vector<1x1x8x4xf32> to vector<8x4xf32>
    %c21 = arith.constant 21 : index
    %c0_7 = arith.constant 0 : index
    %16 = vector.load %arg10[%c21, %c0_7] : memref<222x4xf32, #tpu.memory_space<vmem>>, vector<8x4xf32>
    tpu.vector_store %arg10[%c21, %c0_7], %15 {strides = array<i32>} : memref<222x4xf32, #tpu.memory_space<vmem>>, vector<8x4xf32>,
    %17 = vector.extract_strided_slice %8 {offsets = [0, 2, 0, 0], sizes = [1, 1, 8, 4], strides = [1, 1, 1, 1]} : vector<2x8x8x4xf32> to vector<1x1x8x4xf32>
    %18 = vector.shape_cast %17 : vector<1x1x8x4xf32> to vector<8x4xf32>
    %c31 = arith.constant 31 : index
    %c0_8 = arith.constant 0 : index
    %19 = vector.load %arg10[%c31, %c0_8] : memref<222x4xf32, #tpu.memory_space<vmem>>, vector<8x4xf32>
    tpu.vector_store %arg10[%c31, %c0_8], %18 {strides = array<i32>} : memref<222x4xf32, #tpu.memory_space<vmem>>, vector<8x4xf32>,
    %20 = vector.extract_strided_slice %8 {offsets = [0, 3, 0, 0], sizes = [1, 1, 8, 4], strides = [1, 1, 1, 1]} : vector<2x8x8x4xf32> to vector<1x1x8x4xf32>
    %21 = vector.shape_cast %20 : vector<1x1x8x4xf32> to vector<8x4xf32>
    %c41 = arith.constant 41 : index
    %c0_9 = arith.constant 0 : index
    %22 = vector.load %arg10[%c41, %c0_9] : memref<222x4xf32, #tpu.memory_space<vmem>>, vector<8x4xf32>
    tpu.vector_store %arg10[%c41, %c0_9], %21 {strides = array<i32>} : memref<222x4xf32, #tpu.memory_space<vmem>>, vector<8x4xf32>,
    %23 = vector.extract_strided_slice %8 {offsets = [0, 4, 0, 0], sizes = [1, 1, 8, 4], strides = [1, 1, 1, 1]} : vector<2x8x8x4xf32> to vector<1x1x8x4xf32>
    %24 = vector.shape_cast %23 : vector<1x1x8x4xf32> to vector<8x4xf32>
    %c51 = arith.constant 51 : index
    %c0_10 = arith.constant 0 : index
    %25 = vector.load %arg10[%c51, %c0_10] : memref<222x4xf32, #tpu.memory_space<vmem>>, vector<8x4xf32>
    tpu.vector_store %arg10[%c51, %c0_10], %24 {strides = array<i32>} : memref<222x4xf32, #tpu.memory_space<vmem>>, vector<8x4xf32>,
    %26 = vector.extract_strided_slice %8 {offsets = [0, 5, 0, 0], sizes = [1, 1, 8, 4], strides = [1, 1, 1, 1]} : vector<2x8x8x4xf32> to vector<1x1x8x4xf32>
    %27 = vector.shape_cast %26 : vector<1x1x8x4xf32> to vector<8x4xf32>
    %c61 = arith.constant 61 : index
    %c0_11 = arith.constant 0 : index
    %28 = vector.load %arg10[%c61, %c0_11] : memref<222x4xf32, #tpu.memory_space<vmem>>, vector<8x4xf32>
    tpu.vector_store %arg10[%c61, %c0_11], %27 {strides = array<i32>} : memref<222x4xf32, #tpu.memory_space<vmem>>, vector<8x4xf32>,
    %29 = vector.extract_strided_slice %8 {offsets = [0, 6, 0, 0], sizes = [1, 1, 8, 4], strides = [1, 1, 1, 1]} : vector<2x8x8x4xf32> to vector<1x1x8x4xf32>
    %30 = vector.shape_cast %29 : vector<1x1x8x4xf32> to vector<8x4xf32>
    %c71 = arith.constant 71 : index
    %c0_12 = arith.constant 0 : index
    %31 = vector.load %arg10[%c71, %c0_12] : memref<222x4xf32, #tpu.memory_space<vmem>>, vector<8x4xf32>
    tpu.vector_store %arg10[%c71, %c0_12], %30 {strides = array<i32>} : memref<222x4xf32, #tpu.memory_space<vmem>>, vector<8x4xf32>,
    %32 = vector.extract_strided_slice %8 {offsets = [0, 7, 0, 0], sizes = [1, 1, 8, 4], strides = [1, 1, 1, 1]} : vector<2x8x8x4xf32> to vector<1x1x8x4xf32>
    %33 = vector.shape_cast %32 : vector<1x1x8x4xf32> to vector<8x4xf32>
    %c81 = arith.constant 81 : index
    %c0_13 = arith.constant 0 : index
    %34 = vector.load %arg10[%c81, %c0_13] : memref<222x4xf32, #tpu.memory_space<vmem>>, vector<8x4xf32>
    tpu.vector_store %arg10[%c81, %c0_13], %33 {strides = array<i32>} : memref<222x4xf32, #tpu.memory_space<vmem>>, vector<8x4xf32>,
    %35 = vector.extract_strided_slice %8 {offsets = [1, 0, 0, 0], sizes = [1, 1, 8, 4], strides = [1, 1, 1, 1]} : vector<2x8x8x4xf32> to vector<1x1x8x4xf32>
    %36 = vector.shape_cast %35 : vector<1x1x8x4xf32> to vector<8x4xf32>
    %c111 = arith.constant 111 : index
    %c0_14 = arith.constant 0 : index
    %37 = vector.load %arg10[%c111, %c0_14] : memref<222x4xf32, #tpu.memory_space<vmem>>, vector<8x4xf32>
    tpu.vector_store %arg10[%c111, %c0_14], %36 {strides = array<i32>} : memref<222x4xf32, #tpu.memory_space<vmem>>, vector<8x4xf32>,
    %38 = vector.extract_strided_slice %8 {offsets = [1, 1, 0, 0], sizes = [1, 1, 8, 4], strides = [1, 1, 1, 1]} : vector<2x8x8x4xf32> to vector<1x1x8x4xf32>
    %39 = vector.shape_cast %38 : vector<1x1x8x4xf32> to vector<8x4xf32>
    %c121 = arith.constant 121 : index
    %c0_15 = arith.constant 0 : index
    %40 = vector.load %arg10[%c121, %c0_15] : memref<222x4xf32, #tpu.memory_space<vmem>>, vector<8x4xf32>
    tpu.vector_store %arg10[%c121, %c0_15], %39 {strides = array<i32>} : memref<222x4xf32, #tpu.memory_space<vmem>>, vector<8x4xf32>,
    %41 = vector.extract_strided_slice %8 {offsets = [1, 2, 0, 0], sizes = [1, 1, 8, 4], strides = [1, 1, 1, 1]} : vector<2x8x8x4xf32> to vector<1x1x8x4xf32>
    %42 = vector.shape_cast %41 : vector<1x1x8x4xf32> to vector<8x4xf32>
    %c131 = arith.constant 131 : index
    %c0_16 = arith.constant 0 : index
    %43 = vector.load %arg10[%c131, %c0_16] : memref<222x4xf32, #tpu.memory_space<vmem>>, vector<8x4xf32>
    tpu.vector_store %arg10[%c131, %c0_16], %42 {strides = array<i32>} : memref<222x4xf32, #tpu.memory_space<vmem>>, vector<8x4xf32>,
    %44 = vector.extract_strided_slice %8 {offsets = [1, 3, 0, 0], sizes = [1, 1, 8, 4], strides = [1, 1, 1, 1]} : vector<2x8x8x4xf32> to vector<1x1x8x4xf32>
    %45 = vector.shape_cast %44 : vector<1x1x8x4xf32> to vector<8x4xf32>
    %c141 = arith.constant 141 : index
    %c0_17 = arith.constant 0 : index
    %46 = vector.load %arg10[%c141, %c0_17] : memref<222x4xf32, #tpu.memory_space<vmem>>, vector<8x4xf32>
    tpu.vector_store %arg10[%c141, %c0_17], %45 {strides = array<i32>} : memref<222x4xf32, #tpu.memory_space<vmem>>, vector<8x4xf32>,
    %47 = vector.extract_strided_slice %8 {offsets = [1, 4, 0, 0], sizes = [1, 1, 8, 4], strides = [1, 1, 1, 1]} : vector<2x8x8x4xf32> to vector<1x1x8x4xf32>
    %48 = vector.shape_cast %47 : vector<1x1x8x4xf32> to vector<8x4xf32>
    %c151 = arith.constant 151 : index
    %c0_18 = arith.constant 0 : index
    %49 = vector.load %arg10[%c151, %c0_18] : memref<222x4xf32, #tpu.memory_space<vmem>>, vector<8x4xf32>
    tpu.vector_store %arg10[%c151, %c0_18], %48 {strides = array<i32>} : memref<222x4xf32, #tpu.memory_space<vmem>>, vector<8x4xf32>,
    %50 = vector.extract_strided_slice %8 {offsets = [1, 5, 0, 0], sizes = [1, 1, 8, 4], strides = [1, 1, 1, 1]} : vector<2x8x8x4xf32> to vector<1x1x8x4xf32>
    %51 = vector.shape_cast %50 : vector<1x1x8x4xf32> to vector<8x4xf32>
    %c161 = arith.constant 161 : index
    %c0_19 = arith.constant 0 : index
    %52 = vector.load %arg10[%c161, %c0_19] : memref<222x4xf32, #tpu.memory_space<vmem>>, vector<8x4xf32>
    tpu.vector_store %arg10[%c161, %c0_19], %51 {strides = array<i32>} : memref<222x4xf32, #tpu.memory_space<vmem>>, vector<8x4xf32>,
    %53 = vector.extract_strided_slice %8 {offsets = [1, 6, 0, 0], sizes = [1, 1, 8, 4], strides = [1, 1, 1, 1]} : vector<2x8x8x4xf32> to vector<1x1x8x4xf32>
    %54 = vector.shape_cast %53 : vector<1x1x8x4xf32> to vector<8x4xf32>
    %c171 = arith.constant 171 : index
    %c0_20 = arith.constant 0 : index
    %55 = vector.load %arg10[%c171, %c0_20] : memref<222x4xf32, #tpu.memory_space<vmem>>, vector<8x4xf32>
    tpu.vector_store %arg10[%c171, %c0_20], %54 {strides = array<i32>} : memref<222x4xf32, #tpu.memory_space<vmem>>, vector<8x4xf32>,
    %56 = vector.extract_strided_slice %8 {offsets = [1, 7, 0, 0], sizes = [1, 1, 8, 4], strides = [1, 1, 1, 1]} : vector<2x8x8x4xf32> to vector<1x1x8x4xf32>
    %57 = vector.shape_cast %56 : vector<1x1x8x4xf32> to vector<8x4xf32>
    %c181 = arith.constant 181 : index
    %c0_21 = arith.constant 0 : index
    %58 = vector.load %arg10[%c181, %c0_21] : memref<222x4xf32, #tpu.memory_space<vmem>>, vector<8x4xf32>
    tpu.vector_store %arg10[%c181, %c0_21], %57 {strides = array<i32>} : memref<222x4xf32, #tpu.memory_space<vmem>>, vector<8x4xf32>,
    %c0_22 = arith.constant 0 : index
    %c0_23 = arith.constant 0 : index
    %59 = vector.load %arg10[%c0_22, %c0_23] : memref<222x4xf32, #tpu.memory_space<vmem>>, vector<200x4xf32>
    %c0_24 = arith.constant 0 : index
    %c0_25 = arith.constant 0 : index
    %c0_26 = arith.constant 0 : index
    %60 = vector.load %arg2[%c0_24, %c0_25, %c0_26] : memref<9x8x4xf32, #tpu.memory_space<vmem>>, vector<1x8x4xf32>
    %61 = vector.shape_cast %60 : vector<1x8x4xf32> to vector<8x4xf32>
    %cst_27 = arith.constant dense<0.000000e+00> : vector<8x200xf32>
    %62 = tpu.matmul %61, %59, %cst_27 {dimension_numbers = #tpu.dot_dimension_numbers<[1], [1], [0], [0], [0, 0, 1, 0], [], []>} : vector<8x4xf32>, vector<200x4xf32>, vector<8x200xf32> -> vector<8x200xf32>
    %c1 = arith.constant 1 : index
    %c0_28 = arith.constant 0 : index
    %63 = vector.load %arg10[%c1, %c0_28] : memref<222x4xf32, #tpu.memory_space<vmem>>, vector<200x4xf32>
    %c1_29 = arith.constant 1 : index
    %c0_30 = arith.constant 0 : index
    %c0_31 = arith.constant 0 : index
    %64 = vector.load %arg2[%c1_29, %c0_30, %c0_31] : memref<9x8x4xf32, #tpu.memory_space<vmem>>, vector<1x8x4xf32>
    %65 = vector.shape_cast %64 : vector<1x8x4xf32> to vector<8x4xf32>
    %cst_32 = arith.constant dense<0.000000e+00> : vector<8x200xf32>
    %66 = tpu.matmul %65, %63, %cst_32 {dimension_numbers = #tpu.dot_dimension_numbers<[1], [1], [0], [0], [0, 0, 1, 0], [], []>} : vector<8x4xf32>, vector<200x4xf32>, vector<8x200xf32> -> vector<8x200xf32>
    %67 = arith.addf %62, %66 : vector<8x200xf32>
    %c2 = arith.constant 2 : index
    %c0_33 = arith.constant 0 : index
    %68 = vector.load %arg10[%c2, %c0_33] : memref<222x4xf32, #tpu.memory_space<vmem>>, vector<200x4xf32>
    %c2_34 = arith.constant 2 : index
    %c0_35 = arith.constant 0 : index
    %c0_36 = arith.constant 0 : index
    %69 = vector.load %arg2[%c2_34, %c0_35, %c0_36] : memref<9x8x4xf32, #tpu.memory_space<vmem>>, vector<1x8x4xf32>
    %70 = vector.shape_cast %69 : vector<1x8x4xf32> to vector<8x4xf32>
    %cst_37 = arith.constant dense<0.000000e+00> : vector<8x200xf32>
    %71 = tpu.matmul %70, %68, %cst_37 {dimension_numbers = #tpu.dot_dimension_numbers<[1], [1], [0], [0], [0, 0, 1, 0], [], []>} : vector<8x4xf32>, vector<200x4xf32>, vector<8x200xf32> -> vector<8x200xf32>
    %72 = arith.addf %67, %71 : vector<8x200xf32>
    %c10 = arith.constant 10 : index
    %c0_38 = arith.constant 0 : index
    %73 = vector.load %arg10[%c10, %c0_38] : memref<222x4xf32, #tpu.memory_space<vmem>>, vector<200x4xf32>
    %c3 = arith.constant 3 : index
    %c0_39 = arith.constant 0 : index
    %c0_40 = arith.constant 0 : index
    %74 = vector.load %arg2[%c3, %c0_39, %c0_40] : memref<9x8x4xf32, #tpu.memory_space<vmem>>, vector<1x8x4xf32>
    %75 = vector.shape_cast %74 : vector<1x8x4xf32> to vector<8x4xf32>
    %cst_41 = arith.constant dense<0.000000e+00> : vector<8x200xf32>
    %76 = tpu.matmul %75, %73, %cst_41 {dimension_numbers = #tpu.dot_dimension_numbers<[1], [1], [0], [0], [0, 0, 1, 0], [], []>} : vector<8x4xf32>, vector<200x4xf32>, vector<8x200xf32> -> vector<8x200xf32>
    %77 = arith.addf %72, %76 : vector<8x200xf32>
    %c11_42 = arith.constant 11 : index
    %c0_43 = arith.constant 0 : index
    %78 = vector.load %arg10[%c11_42, %c0_43] : memref<222x4xf32, #tpu.memory_space<vmem>>, vector<200x4xf32>
    %c4 = arith.constant 4 : index
    %c0_44 = arith.constant 0 : index
    %c0_45 = arith.constant 0 : index
    %79 = vector.load %arg2[%c4, %c0_44, %c0_45] : memref<9x8x4xf32, #tpu.memory_space<vmem>>, vector<1x8x4xf32>
    %80 = vector.shape_cast %79 : vector<1x8x4xf32> to vector<8x4xf32>
    %cst_46 = arith.constant dense<0.000000e+00> : vector<8x200xf32>
    %81 = tpu.matmul %80, %78, %cst_46 {dimension_numbers = #tpu.dot_dimension_numbers<[1], [1], [0], [0], [0, 0, 1, 0], [], []>} : vector<8x4xf32>, vector<200x4xf32>, vector<8x200xf32> -> vector<8x200xf32>
    %82 = arith.addf %77, %81 : vector<8x200xf32>
    %c12 = arith.constant 12 : index
    %c0_47 = arith.constant 0 : index
    %83 = vector.load %arg10[%c12, %c0_47] : memref<222x4xf32, #tpu.memory_space<vmem>>, vector<200x4xf32>
    %c5 = arith.constant 5 : index
    %c0_48 = arith.constant 0 : index
    %c0_49 = arith.constant 0 : index
    %84 = vector.load %arg2[%c5, %c0_48, %c0_49] : memref<9x8x4xf32, #tpu.memory_space<vmem>>, vector<1x8x4xf32>
    %85 = vector.shape_cast %84 : vector<1x8x4xf32> to vector<8x4xf32>
    %cst_50 = arith.constant dense<0.000000e+00> : vector<8x200xf32>
    %86 = tpu.matmul %85, %83, %cst_50 {dimension_numbers = #tpu.dot_dimension_numbers<[1], [1], [0], [0], [0, 0, 1, 0], [], []>} : vector<8x4xf32>, vector<200x4xf32>, vector<8x200xf32> -> vector<8x200xf32>
    %87 = arith.addf %82, %86 : vector<8x200xf32>
    %c20 = arith.constant 20 : index
    %c0_51 = arith.constant 0 : index
    %88 = vector.load %arg10[%c20, %c0_51] : memref<222x4xf32, #tpu.memory_space<vmem>>, vector<200x4xf32>
    %c6 = arith.constant 6 : index
    %c0_52 = arith.constant 0 : index
    %c0_53 = arith.constant 0 : index
    %89 = vector.load %arg2[%c6, %c0_52, %c0_53] : memref<9x8x4xf32, #tpu.memory_space<vmem>>, vector<1x8x4xf32>
    %90 = vector.shape_cast %89 : vector<1x8x4xf32> to vector<8x4xf32>
    %cst_54 = arith.constant dense<0.000000e+00> : vector<8x200xf32>
    %91 = tpu.matmul %90, %88, %cst_54 {dimension_numbers = #tpu.dot_dimension_numbers<[1], [1], [0], [0], [0, 0, 1, 0], [], []>} : vector<8x4xf32>, vector<200x4xf32>, vector<8x200xf32> -> vector<8x200xf32>
    %92 = arith.addf %87, %91 : vector<8x200xf32>
    %c21_55 = arith.constant 21 : index
    %c0_56 = arith.constant 0 : index
    %93 = vector.load %arg10[%c21_55, %c0_56] : memref<222x4xf32, #tpu.memory_space<vmem>>, vector<200x4xf32>
    %c7 = arith.constant 7 : index
    %c0_57 = arith.constant 0 : index
    %c0_58 = arith.constant 0 : index
    %94 = vector.load %arg2[%c7, %c0_57, %c0_58] : memref<9x8x4xf32, #tpu.memory_space<vmem>>, vector<1x8x4xf32>
    %95 = vector.shape_cast %94 : vector<1x8x4xf32> to vector<8x4xf32>
    %cst_59 = arith.constant dense<0.000000e+00> : vector<8x200xf32>
    %96 = tpu.matmul %95, %93, %cst_59 {dimension_numbers = #tpu.dot_dimension_numbers<[1], [1], [0], [0], [0, 0, 1, 0], [], []>} : vector<8x4xf32>, vector<200x4xf32>, vector<8x200xf32> -> vector<8x200xf32>
    %97 = arith.addf %92, %96 : vector<8x200xf32>
    %c22 = arith.constant 22 : index
    %c0_60 = arith.constant 0 : index
    %98 = vector.load %arg10[%c22, %c0_60] : memref<222x4xf32, #tpu.memory_space<vmem>>, vector<200x4xf32>
    %c8 = arith.constant 8 : index
    %c0_61 = arith.constant 0 : index
    %c0_62 = arith.constant 0 : index
    %99 = vector.load %arg2[%c8, %c0_61, %c0_62] : memref<9x8x4xf32, #tpu.memory_space<vmem>>, vector<1x8x4xf32>
    %100 = vector.shape_cast %99 : vector<1x8x4xf32> to vector<8x4xf32>
    %cst_63 = arith.constant dense<0.000000e+00> : vector<8x200xf32>
    %101 = tpu.matmul %100, %98, %cst_63 {dimension_numbers = #tpu.dot_dimension_numbers<[1], [1], [0], [0], [0, 0, 1, 0], [], []>} : vector<8x4xf32>, vector<200x4xf32>, vector<8x200xf32> -> vector<8x200xf32>
    %102 = arith.addf %97, %101 : vector<8x200xf32>
    %c0_64 = arith.constant 0 : index
    %c0_65 = arith.constant 0 : index
    %103 = vector.load %arg3[%c0_64, %c0_65] : memref<8x1xf32, #tpu.memory_space<vmem>>, vector<8x1xf32>
    %104 = vector.broadcast %103 : vector<8x1xf32> to vector<8x200xf32>
    %105 = arith.mulf %102, %104 : vector<8x200xf32>
    %c0_66 = arith.constant 0 : index
    %c0_67 = arith.constant 0 : index
    %106 = vector.load %arg4[%c0_66, %c0_67] : memref<8x1xf32, #tpu.memory_space<vmem>>, vector<8x1xf32>
    %107 = vector.broadcast %106 : vector<8x1xf32> to vector<8x200xf32>
    %108 = arith.addf %105, %107 : vector<8x200xf32>
    %cst_68 = arith.constant 0.000000e+00 : f32
    %109 = vector.broadcast %cst_68 : f32 to vector<8x200xf32>
    %110 = arith.maximumf %108, %109 : vector<8x200xf32>
    %c0_69 = arith.constant 0 : index
    %c0_70 = arith.constant 0 : index
    %111 = vector.load %arg8[%c0_69, %c0_70] : memref<1x200xf32, #tpu.memory_space<vmem>>, vector<1x200xf32>
    %112 = vector.broadcast %111 : vector<1x200xf32> to vector<8x200xf32>
    %113 = arith.mulf %110, %112 : vector<8x200xf32>
    %cst_71 = arith.constant 0.000000e+00 : f32
    %114 = vector.broadcast %cst_71 : f32 to vector<8x222xf32>
    %c0_72 = arith.constant 0 : index
    %c0_73 = arith.constant 0 : index
    %115 = vector.load %arg11[%c0_72, %c0_73] : memref<8x222xf32, #tpu.memory_space<vmem>>, vector<8x222xf32>
    tpu.vector_store %arg11[%c0_72, %c0_73], %114 {strides = array<i32>} : memref<8x222xf32, #tpu.memory_space<vmem>>, vector<8x222xf32>,
    %c0_74 = arith.constant 0 : index
    %c11_75 = arith.constant 11 : index
    %116 = vector.load %arg11[%c0_74, %c11_75] : memref<8x222xf32, #tpu.memory_space<vmem>>, vector<8x200xf32>
    tpu.vector_store %arg11[%c0_74, %c11_75], %113 {strides = array<i32>} : memref<8x222xf32, #tpu.memory_space<vmem>>, vector<8x200xf32>,
    %c0_76 = arith.constant 0 : index
    %c0_77 = arith.constant 0 : index
    %117 = vector.load %arg11[%c0_76, %c0_77] : memref<8x222xf32, #tpu.memory_space<vmem>>, vector<8x200xf32>
    %c0_78 = arith.constant 0 : index
    %c0_79 = arith.constant 0 : index
    %c0_80 = arith.constant 0 : index
    %118 = vector.load %arg5[%c0_78, %c0_79, %c0_80] : memref<9x8x8xf32, #tpu.memory_space<vmem>>, vector<1x8x8xf32>
    %119 = vector.shape_cast %118 : vector<1x8x8xf32> to vector<8x8xf32>
    %cst_81 = arith.constant dense<0.000000e+00> : vector<8x200xf32>
    %120 = tpu.matmul %119, %117, %cst_81 {dimension_numbers = #tpu.dot_dimension_numbers<[1], [0], [0], [1], [0, 0, 1, 1], [], []>} : vector<8x8xf32>, vector<8x200xf32>, vector<8x200xf32> -> vector<8x200xf32>
    %c0_82 = arith.constant 0 : index
    %c1_83 = arith.constant 1 : index
    %121 = vector.load %arg11[%c0_82, %c1_83] : memref<8x222xf32, #tpu.memory_space<vmem>>, vector<8x200xf32>
    %c1_84 = arith.constant 1 : index
    %c0_85 = arith.constant 0 : index
    %c0_86 = arith.constant 0 : index
    %122 = vector.load %arg5[%c1_84, %c0_85, %c0_86] : memref<9x8x8xf32, #tpu.memory_space<vmem>>, vector<1x8x8xf32>
    %123 = vector.shape_cast %122 : vector<1x8x8xf32> to vector<8x8xf32>
    %cst_87 = arith.constant dense<0.000000e+00> : vector<8x200xf32>
    %124 = tpu.matmul %123, %121, %cst_87 {dimension_numbers = #tpu.dot_dimension_numbers<[1], [0], [0], [1], [0, 0, 1, 1], [], []>} : vector<8x8xf32>, vector<8x200xf32>, vector<8x200xf32> -> vector<8x200xf32>
    %125 = arith.addf %120, %124 : vector<8x200xf32>
    %c0_88 = arith.constant 0 : index
    %c2_89 = arith.constant 2 : index
    %126 = vector.load %arg11[%c0_88, %c2_89] : memref<8x222xf32, #tpu.memory_space<vmem>>, vector<8x200xf32>
    %c2_90 = arith.constant 2 : index
    %c0_91 = arith.constant 0 : index
    %c0_92 = arith.constant 0 : index
    %127 = vector.load %arg5[%c2_90, %c0_91, %c0_92] : memref<9x8x8xf32, #tpu.memory_space<vmem>>, vector<1x8x8xf32>
    %128 = vector.shape_cast %127 : vector<1x8x8xf32> to vector<8x8xf32>
    %cst_93 = arith.constant dense<0.000000e+00> : vector<8x200xf32>
    %129 = tpu.matmul %128, %126, %cst_93 {dimension_numbers = #tpu.dot_dimension_numbers<[1], [0], [0], [1], [0, 0, 1, 1], [], []>} : vector<8x8xf32>, vector<8x200xf32>, vector<8x200xf32> -> vector<8x200xf32>
    %130 = arith.addf %125, %129 : vector<8x200xf32>
    %c0_94 = arith.constant 0 : index
    %c10_95 = arith.constant 10 : index
    %131 = vector.load %arg11[%c0_94, %c10_95] : memref<8x222xf32, #tpu.memory_space<vmem>>, vector<8x200xf32>
    %c3_96 = arith.constant 3 : index
    %c0_97 = arith.constant 0 : index
    %c0_98 = arith.constant 0 : index
    %132 = vector.load %arg5[%c3_96, %c0_97, %c0_98] : memref<9x8x8xf32, #tpu.memory_space<vmem>>, vector<1x8x8xf32>
    %133 = vector.shape_cast %132 : vector<1x8x8xf32> to vector<8x8xf32>
    %cst_99 = arith.constant dense<0.000000e+00> : vector<8x200xf32>
    %134 = tpu.matmul %133, %131, %cst_99 {dimension_numbers = #tpu.dot_dimension_numbers<[1], [0], [0], [1], [0, 0, 1, 1], [], []>} : vector<8x8xf32>, vector<8x200xf32>, vector<8x200xf32> -> vector<8x200xf32>
    %135 = arith.addf %130, %134 : vector<8x200xf32>
    %c0_100 = arith.constant 0 : index
    %c11_101 = arith.constant 11 : index
    %136 = vector.load %arg11[%c0_100, %c11_101] : memref<8x222xf32, #tpu.memory_space<vmem>>, vector<8x200xf32>
    %c4_102 = arith.constant 4 : index
    %c0_103 = arith.constant 0 : index
    %c0_104 = arith.constant 0 : index
    %137 = vector.load %arg5[%c4_102, %c0_103, %c0_104] : memref<9x8x8xf32, #tpu.memory_space<vmem>>, vector<1x8x8xf32>
    %138 = vector.shape_cast %137 : vector<1x8x8xf32> to vector<8x8xf32>
    %cst_105 = arith.constant dense<0.000000e+00> : vector<8x200xf32>
    %139 = tpu.matmul %138, %136, %cst_105 {dimension_numbers = #tpu.dot_dimension_numbers<[1], [0], [0], [1], [0, 0, 1, 1], [], []>} : vector<8x8xf32>, vector<8x200xf32>, vector<8x200xf32> -> vector<8x200xf32>
    %140 = arith.addf %135, %139 : vector<8x200xf32>
    %c0_106 = arith.constant 0 : index
    %c12_107 = arith.constant 12 : index
    %141 = vector.load %arg11[%c0_106, %c12_107] : memref<8x222xf32, #tpu.memory_space<vmem>>, vector<8x200xf32>
    %c5_108 = arith.constant 5 : index
    %c0_109 = arith.constant 0 : index
    %c0_110 = arith.constant 0 : index
    %142 = vector.load %arg5[%c5_108, %c0_109, %c0_110] : memref<9x8x8xf32, #tpu.memory_space<vmem>>, vector<1x8x8xf32>
    %143 = vector.shape_cast %142 : vector<1x8x8xf32> to vector<8x8xf32>
    %cst_111 = arith.constant dense<0.000000e+00> : vector<8x200xf32>
    %144 = tpu.matmul %143, %141, %cst_111 {dimension_numbers = #tpu.dot_dimension_numbers<[1], [0], [0], [1], [0, 0, 1, 1], [], []>} : vector<8x8xf32>, vector<8x200xf32>, vector<8x200xf32> -> vector<8x200xf32>
    %145 = arith.addf %140, %144 : vector<8x200xf32>
    %c0_112 = arith.constant 0 : index
    %c20_113 = arith.constant 20 : index
    %146 = vector.load %arg11[%c0_112, %c20_113] : memref<8x222xf32, #tpu.memory_space<vmem>>, vector<8x200xf32>
    %c6_114 = arith.constant 6 : index
    %c0_115 = arith.constant 0 : index
    %c0_116 = arith.constant 0 : index
    %147 = vector.load %arg5[%c6_114, %c0_115, %c0_116] : memref<9x8x8xf32, #tpu.memory_space<vmem>>, vector<1x8x8xf32>
    %148 = vector.shape_cast %147 : vector<1x8x8xf32> to vector<8x8xf32>
    %cst_117 = arith.constant dense<0.000000e+00> : vector<8x200xf32>
    %149 = tpu.matmul %148, %146, %cst_117 {dimension_numbers = #tpu.dot_dimension_numbers<[1], [0], [0], [1], [0, 0, 1, 1], [], []>} : vector<8x8xf32>, vector<8x200xf32>, vector<8x200xf32> -> vector<8x200xf32>
    %150 = arith.addf %145, %149 : vector<8x200xf32>
    %c0_118 = arith.constant 0 : index
    %c21_119 = arith.constant 21 : index
    %151 = vector.load %arg11[%c0_118, %c21_119] : memref<8x222xf32, #tpu.memory_space<vmem>>, vector<8x200xf32>
    %c7_120 = arith.constant 7 : index
    %c0_121 = arith.constant 0 : index
    %c0_122 = arith.constant 0 : index
    %152 = vector.load %arg5[%c7_120, %c0_121, %c0_122] : memref<9x8x8xf32, #tpu.memory_space<vmem>>, vector<1x8x8xf32>
    %153 = vector.shape_cast %152 : vector<1x8x8xf32> to vector<8x8xf32>
    %cst_123 = arith.constant dense<0.000000e+00> : vector<8x200xf32>
    %154 = tpu.matmul %153, %151, %cst_123 {dimension_numbers = #tpu.dot_dimension_numbers<[1], [0], [0], [1], [0, 0, 1, 1], [], []>} : vector<8x8xf32>, vector<8x200xf32>, vector<8x200xf32> -> vector<8x200xf32>
    %155 = arith.addf %150, %154 : vector<8x200xf32>
    %c0_124 = arith.constant 0 : index
    %c22_125 = arith.constant 22 : index
    %156 = vector.load %arg11[%c0_124, %c22_125] : memref<8x222xf32, #tpu.memory_space<vmem>>, vector<8x200xf32>
    %c8_126 = arith.constant 8 : index
    %c0_127 = arith.constant 0 : index
    %c0_128 = arith.constant 0 : index
    %157 = vector.load %arg5[%c8_126, %c0_127, %c0_128] : memref<9x8x8xf32, #tpu.memory_space<vmem>>, vector<1x8x8xf32>
    %158 = vector.shape_cast %157 : vector<1x8x8xf32> to vector<8x8xf32>
    %cst_129 = arith.constant dense<0.000000e+00> : vector<8x200xf32>
    %159 = tpu.matmul %158, %156, %cst_129 {dimension_numbers = #tpu.dot_dimension_numbers<[1], [0], [0], [1], [0, 0, 1, 1], [], []>} : vector<8x8xf32>, vector<8x200xf32>, vector<8x200xf32> -> vector<8x200xf32>
    %160 = arith.addf %155, %159 : vector<8x200xf32>
    %c0_130 = arith.constant 0 : index
    %c0_131 = arith.constant 0 : index
    %161 = vector.load %arg6[%c0_130, %c0_131] : memref<8x1xf32, #tpu.memory_space<vmem>>, vector<8x1xf32>
    %162 = vector.broadcast %161 : vector<8x1xf32> to vector<8x200xf32>
    %163 = arith.mulf %160, %162 : vector<8x200xf32>
    %c0_132 = arith.constant 0 : index
    %c0_133 = arith.constant 0 : index
    %164 = vector.load %arg7[%c0_132, %c0_133] : memref<8x1xf32, #tpu.memory_space<vmem>>, vector<8x1xf32>
    %165 = vector.broadcast %164 : vector<8x1xf32> to vector<8x200xf32>
    %166 = arith.addf %163, %165 : vector<8x200xf32>
    %cst_134 = arith.constant 0.000000e+00 : f32
    %167 = vector.broadcast %cst_134 : f32 to vector<8x200xf32>
    %168 = arith.maximumf %166, %167 : vector<8x200xf32>
    %c0_135 = arith.constant 0 : index
    %c0_136 = arith.constant 0 : index
    %169 = vector.load %arg9[%c0_135, %c0_136] : memref<8x200xf32, #tpu.memory_space<vmem>>, vector<8x200xf32>
    tpu.vector_store %arg9[%c0_135, %c0_136], %168 {strides = array<i32>} : memref<8x200xf32, #tpu.memory_space<vmem>>, vector<8x200xf32>,
    return
  }
  func.func @transform_0(%arg0: i32) -> (i32, i32, i32, i32, i32) {
    %c0_i32 = arith.constant 0 : i32
    %c0_i32_0 = arith.constant 0 : i32
    %c0_i32_1 = arith.constant 0 : i32
    %c0_i32_2 = arith.constant 0 : i32
    %c0_i32_3 = arith.constant 0 : i32
    %c0_i32_4 = arith.constant 0 : i32
    return %c0_i32, %c0_i32_0, %c0_i32_1, %c0_i32_2, %c0_i32_3 : i32, i32, i32, i32, i32
  }
  func.func @transform_1(%arg0: i32) -> (i32, i32, i32) {
    %c0_i32 = arith.constant 0 : i32
    %c0_i32_0 = arith.constant 0 : i32
    %c0_i32_1 = arith.constant 0 : i32
    %c0_i32_2 = arith.constant 0 : i32
    return %c0_i32, %c0_i32_0, %c0_i32_1 : i32, i32, i32
  }
  func.func @transform_2(%arg0: i32) -> (i32, i32) {
    %c0_i32 = arith.constant 0 : i32
    %c0_i32_0 = arith.constant 0 : i32
    %c0_i32_1 = arith.constant 0 : i32
    return %c0_i32, %c0_i32_0 : i32, i32
  }
  func.func @transform_3(%arg0: i32) -> (i32, i32) {
    %c0_i32 = arith.constant 0 : i32
    %c0_i32_0 = arith.constant 0 : i32
    %c0_i32_1 = arith.constant 0 : i32
    return %c0_i32, %c0_i32_0 : i32, i32
  }
  func.func @transform_4(%arg0: i32) -> (i32, i32, i32) {
    %c0_i32 = arith.constant 0 : i32
    %c0_i32_0 = arith.constant 0 : i32
    %c0_i32_1 = arith.constant 0 : i32
    %c0_i32_2 = arith.constant 0 : i32
    return %c0_i32, %c0_i32_0, %c0_i32_1 : i32, i32, i32
  }
  func.func @transform_5(%arg0: i32) -> (i32, i32) {
    %c0_i32 = arith.constant 0 : i32
    %c0_i32_0 = arith.constant 0 : i32
    %c0_i32_1 = arith.constant 0 : i32
    return %c0_i32, %c0_i32_0 : i32, i32
  }
  func.func @transform_6(%arg0: i32) -> (i32, i32) {
    %c0_i32 = arith.constant 0 : i32
    %c0_i32_0 = arith.constant 0 : i32
    %c0_i32_1 = arith.constant 0 : i32
    return %c0_i32, %c0_i32_0 : i32, i32
  }
  func.func @transform_7(%arg0: i32) -> (i32, i32) {
    %c0_i32 = arith.constant 0 : i32
    %c0_i32_0 = arith.constant 0 : i32
    %c0_i32_1 = arith.constant 0 : i32
    return %c0_i32, %c0_i32_0 : i32, i32
  }
  func.func @transform_8(%arg0: i32) -> (i32, i32) {
    %c0_i32 = arith.constant 0 : i32
    %c0_i32_0 = arith.constant 0 : i32
    %c0_i32_1 = arith.constant 0 : i32
    return %c0_i32, %c0_i32_0 : i32, i32
  }
}

</mosaic_0001>

<llo_original>
// kernel: down_forward.1
$region0: #{down_forward.1}
  #allocation0 [shape = 'u32[]', space=smem, size = 0x4, offset = 0x4, fixed_abs, tag = 'smem constant byte address 0x4 - core index']
  #allocation1 [shape = 'u32[144,128]{1,0:T(1,128)}', space=vmem, size = 0x12000, scoped, tag = 'internal scratch']
  #allocation2 [shape = 'f32[222,4]{1,0:T(8,128)}', space=vmem, size = 0x1c000, scoped, tag = 'scratch operand']
  #allocation3 [shape = 'f32[8,222]{1,0:T(8,128)}', space=vmem, size = 0x2000, scoped, tag = 'scratch operand']
  %s0 = inlined_call_operand.vmem [shape: f32[2,8,2,8,8], index: 0, kind: input, shape index: {}]
  %s1 = inlined_call_operand.vmem [shape: f32[9,8,4], index: 1, kind: input, shape index: {}]
  %s2 = inlined_call_operand.vmem [shape: f32[8,1], index: 2, kind: input, shape index: {}]
  %s3 = inlined_call_operand.vmem [shape: f32[8,1], index: 3, kind: input, shape index: {}]
  %s4 = inlined_call_operand.vmem [shape: f32[9,8,8], index: 4, kind: input, shape index: {}]
  %s5 = inlined_call_operand.vmem [shape: f32[8,1], index: 5, kind: input, shape index: {}]
  %s6 = inlined_call_operand.vmem [shape: f32[8,1], index: 6, kind: input, shape index: {}]
  %s7 = inlined_call_operand.vmem [shape: f32[1,200], index: 7, kind: input, shape index: {}]
  %s8 = inlined_call_operand.vmem [shape: f32[8,200], index: 8, kind: output, shape index: {}]
  %s9 = sld [smem:[#allocation0]]
  $region42: #{down_forward.1} parent=0
    _
  %s11 = ssub.s32 1, %s9
  %s12 = scalar_select 0, %s11, %s9
  // Predicated region
  $region2: #{down_forward.1} parent=0 // pred_check
    _
  $region3: #{down_forward.1} parent=0 // pred_check_branch
    %14 = sbr.rel (0) target = $region5
  $region4: #{down_forward.1} parent=0 // pred_region
    _
  $region5: #{down_forward.1} parent=0 // pred_fallthru
    _
  // Predicated region
  $region6: #{down_forward.1} parent=0 // pred_check
    _
  $region7: #{down_forward.1} parent=0 // pred_check_branch
    %16 = sbr.rel (0) target = $region9
  $region8: #{down_forward.1} parent=0 // pred_region
    _
  $region9: #{down_forward.1} parent=0 // pred_fallthru
    _
  // Predicated region
  $region10: #{down_forward.1} parent=0 // pred_check
    _
  $region11: #{down_forward.1} parent=0 // pred_check_branch
    %18 = sbr.rel (0) target = $region13
  $region12: #{down_forward.1} parent=0 // pred_region
    _
  $region13: #{down_forward.1} parent=0 // pred_fallthru
    _
  // Predicated region
  $region14: #{down_forward.1} parent=0 // pred_check
    _
  $region15: #{down_forward.1} parent=0 // pred_check_branch
    %20 = sbr.rel (0) target = $region17
  $region16: #{down_forward.1} parent=0 // pred_region
    _
  $region17: #{down_forward.1} parent=0 // pred_fallthru
    _
  // Predicated region
  $region18: #{down_forward.1} parent=0 // pred_check
    _
  $region19: #{down_forward.1} parent=0 // pred_check_branch
    %22 = sbr.rel (0) target = $region21
  $region20: #{down_forward.1} parent=0 // pred_region
    _
  $region21: #{down_forward.1} parent=0 // pred_fallthru
    _
  // Predicated region
  $region22: #{down_forward.1} parent=0 // pred_check
    _
  $region23: #{down_forward.1} parent=0 // pred_check_branch
    %24 = sbr.rel (0) target = $region25
  $region24: #{down_forward.1} parent=0 // pred_region
    _
  $region25: #{down_forward.1} parent=0 // pred_fallthru
    _
  // Predicated region
  $region26: #{down_forward.1} parent=0 // pred_check
    _
  $region27: #{down_forward.1} parent=0 // pred_check_branch
    %26 = sbr.rel (0) target = $region29
  $region28: #{down_forward.1} parent=0 // pred_region
    _
  $region29: #{down_forward.1} parent=0 // pred_fallthru
    _
  // Predicated region
  $region30: #{down_forward.1} parent=0 // pred_check
    _
  $region31: #{down_forward.1} parent=0 // pred_check_branch
    %28 = sbr.rel (0) target = $region33
  $region32: #{down_forward.1} parent=0 // pred_region
    _
  $region33: #{down_forward.1} parent=0 // pred_fallthru
    _
  %v29 = vld [vmem:[%s0] sm:$0xff]
  %v30 = vld [vmem:[%s0 + $0x8] sm:$0xff]
  %v31 = vld [vmem:[%s0 + $0x10] sm:$0xff]
  %v32 = vld [vmem:[%s0 + $0x18] sm:$0xff]
  %v33 = vld [vmem:[%s0 + $0x20] sm:$0xff]
  %v34 = vld [vmem:[%s0 + $0x28] sm:$0xff]
  %v35 = vld [vmem:[%s0 + $0x30] sm:$0xff]
  %v36 = vld [vmem:[%s0 + $0x38] sm:$0xff]
  %v37 = vld [vmem:[%s0 + $0x40] sm:$0xff]
  %v38 = vld [vmem:[%s0 + $0x48] sm:$0xff]
  %v39 = vld [vmem:[%s0 + $0x50] sm:$0xff]
  %v40 = vld [vmem:[%s0 + $0x58] sm:$0xff]
  %v41 = vld [vmem:[%s0 + $0x60] sm:$0xff]
  %v42 = vld [vmem:[%s0 + $0x68] sm:$0xff]
  %v43 = vld [vmem:[%s0 + $0x70] sm:$0xff]
  %v44 = vld [vmem:[%s0 + $0x78] sm:$0xff]
  %v45 = vld [vmem:[%s0 + $0x80] sm:$0xff]
  %v46 = vld [vmem:[%s0 + $0x88] sm:$0xff]
  %v47 = vld [vmem:[%s0 + $0x90] sm:$0xff]
  %v48 = vld [vmem:[%s0 + $0x98] sm:$0xff]
  %v49 = vld [vmem:[%s0 + $0xa0] sm:$0xff]
  %v50 = vld [vmem:[%s0 + $0xa8] sm:$0xff]
  %v51 = vld [vmem:[%s0 + $0xb0] sm:$0xff]
  %v52 = vld [vmem:[%s0 + $0xb8] sm:$0xff]
  %v53 = vld [vmem:[%s0 + $0xc0] sm:$0xff]
  %v54 = vld [vmem:[%s0 + $0xc8] sm:$0xff]
  %v55 = vld [vmem:[%s0 + $0xd0] sm:$0xff]
  %v56 = vld [vmem:[%s0 + $0xd8] sm:$0xff]
  %v57 = vld [vmem:[%s0 + $0xe0] sm:$0xff]
  %v58 = vld [vmem:[%s0 + $0xe8] sm:$0xff]
  %v59 = vld [vmem:[%s0 + $0xf0] sm:$0xff]
  %v60 = vld [vmem:[%s0 + $0xf8] sm:$0xff]
  %v61 = vmax.f32 %v29, %v30
  %v62 = vmax.f32 %v31, %v32
  %v63 = vmax.f32 %v33, %v34
  %v64 = vmax.f32 %v35, %v36
  %v65 = vmax.f32 %v37, %v38
  %v66 = vmax.f32 %v39, %v40
  %v67 = vmax.f32 %v41, %v42
  %v68 = vmax.f32 %v43, %v44
  %v69 = vmax.f32 %v45, %v46
  %v70 = vmax.f32 %v47, %v48
  %v71 = vmax.f32 %v49, %v50
  %v72 = vmax.f32 %v51, %v52
  %v73 = vmax.f32 %v53, %v54
  %v74 = vmax.f32 %v55, %v56
  %v75 = vmax.f32 %v57, %v58
  %v76 = vmax.f32 %v59, %v60
  %93 = vrot.lane.b32.xlu0 %v61, 124
  %v94 = vpop.permute.xlu0 %93
  %95 = vrot.lane.b32.xlu0 %v62, 124
  %v96 = vpop.permute.xlu0 %95
  %97 = vrot.lane.b32.xlu0 %v63, 124
  %v98 = vpop.permute.xlu0 %97
  %99 = vrot.lane.b32.xlu0 %v64, 124
  %v100 = vpop.permute.xlu0 %99
  %101 = vrot.lane.b32.xlu0 %v65, 124
  %v102 = vpop.permute.xlu0 %101
  %103 = vrot.lane.b32.xlu0 %v66, 124
  %v104 = vpop.permute.xlu0 %103
  %105 = vrot.lane.b32.xlu0 %v67, 124
  %v106 = vpop.permute.xlu0 %105
  %107 = vrot.lane.b32.xlu0 %v68, 124
  %v108 = vpop.permute.xlu0 %107
  %109 = vrot.lane.b32.xlu0 %v69, 124
  %v110 = vpop.permute.xlu0 %109
  %111 = vrot.lane.b32.xlu0 %v70, 124
  %v112 = vpop.permute.xlu0 %111
  %113 = vrot.lane.b32.xlu0 %v71, 124
  %v114 = vpop.permute.xlu0 %113
  %115 = vrot.lane.b32.xlu0 %v72, 124
  %v116 = vpop.permute.xlu0 %115
  %117 = vrot.lane.b32.xlu0 %v73, 124
  %v118 = vpop.permute.xlu0 %117
  %119 = vrot.lane.b32.xlu0 %v74, 124
  %v120 = vpop.permute.xlu0 %119
  %121 = vrot.lane.b32.xlu0 %v75, 124
  %v122 = vpop.permute.xlu0 %121
  %123 = vrot.lane.b32.xlu0 %v76, 124
  %v124 = vpop.permute.xlu0 %123
  %v141 = vmax.f32 %v61, %v94
  %v142 = vmax.f32 %v62, %v96
  %v143 = vmax.f32 %v63, %v98
  %v144 = vmax.f32 %v64, %v100
  %v145 = vmax.f32 %v65, %v102
  %v146 = vmax.f32 %v66, %v104
  %v147 = vmax.f32 %v67, %v106
  %v148 = vmax.f32 %v68, %v108
  %v149 = vmax.f32 %v69, %v110
  %v150 = vmax.f32 %v70, %v112
  %v151 = vmax.f32 %v71, %v114
  %v152 = vmax.f32 %v72, %v116
  %v153 = vmax.f32 %v73, %v118
  %v154 = vmax.f32 %v74, %v120
  %v155 = vmax.f32 %v75, %v122
  %v156 = vmax.f32 %v76, %v124
  %vm157 = vcmask 31744
  %158 = vst.msk [vmem:[#allocation2] sm:$0xff] %vm157, 0.0
  %159 = vst.msk [vmem:[#allocation2 + $0x8] sm:$0xff] %vm157, 0.0
  %160 = vst.msk [vmem:[#allocation2 + $0x10] sm:$0xff] %vm157, 0.0
  %161 = vst.msk [vmem:[#allocation2 + $0x18] sm:$0xff] %vm157, 0.0
  %162 = vst.msk [vmem:[#allocation2 + $0x20] sm:$0xff] %vm157, 0.0
  %163 = vst.msk [vmem:[#allocation2 + $0x28] sm:$0xff] %vm157, 0.0
  %164 = vst.msk [vmem:[#allocation2 + $0x30] sm:$0xff] %vm157, 0.0
  %165 = vst.msk [vmem:[#allocation2 + $0x38] sm:$0xff] %vm157, 0.0
  %166 = vst.msk [vmem:[#allocation2 + $0x40] sm:$0xff] %vm157, 0.0
  %167 = vst.msk [vmem:[#allocation2 + $0x48] sm:$0xff] %vm157, 0.0
  %168 = vst.msk [vmem:[#allocation2 + $0x50] sm:$0xff] %vm157, 0.0
  %169 = vst.msk [vmem:[#allocation2 + $0x58] sm:$0xff] %vm157, 0.0
  %170 = vst.msk [vmem:[#allocation2 + $0x60] sm:$0xff] %vm157, 0.0
  %171 = vst.msk [vmem:[#allocation2 + $0x68] sm:$0xff] %vm157, 0.0
  %172 = vst.msk [vmem:[#allocation2 + $0x70] sm:$0xff] %vm157, 0.0
  %173 = vst.msk [vmem:[#allocation2 + $0x78] sm:$0xff] %vm157, 0.0
  %174 = vst.msk [vmem:[#allocation2 + $0x80] sm:$0xff] %vm157, 0.0
  %175 = vst.msk [vmem:[#allocation2 + $0x88] sm:$0xff] %vm157, 0.0
  %176 = vst.msk [vmem:[#allocation2 + $0x90] sm:$0xff] %vm157, 0.0
  %177 = vst.msk [vmem:[#allocation2 + $0x98] sm:$0xff] %vm157, 0.0
  %178 = vst.msk [vmem:[#allocation2 + $0xa0] sm:$0xff] %vm157, 0.0
  %179 = vst.msk [vmem:[#allocation2 + $0xa8] sm:$0xff] %vm157, 0.0
  %180 = vst.msk [vmem:[#allocation2 + $0xb0] sm:$0xff] %vm157, 0.0
  %181 = vst.msk [vmem:[#allocation2 + $0xb8] sm:$0xff] %vm157, 0.0
  %182 = vst.msk [vmem:[#allocation2 + $0xc0] sm:$0xff] %vm157, 0.0
  %183 = vst.msk [vmem:[#allocation2 + $0xc8] sm:$0xff] %vm157, 0.0
  %184 = vst.msk [vmem:[#allocation2 + $0xd0] sm:$0xff] %vm157, 0.0
  %vm185 = vcmask 29696
  %186 = vst.msk [vmem:[#allocation2 + $0xd8] sm:$0x3f] %vm185, 0.0
  %187 = vst.msk [vmem:[#allocation2 + $0xb] sm:$0xff] %vm157, %v141
  %188 = vst.msk [vmem:[#allocation2 + $0x15] sm:$0xff] %vm157, %v142
  %189 = vst.msk [vmem:[#allocation2 + $0x1f] sm:$0xff] %vm157, %v143
  %190 = vst.msk [vmem:[#allocation2 + $0x29] sm:$0xff] %vm157, %v144
  %191 = vst.msk [vmem:[#allocation2 + $0x33] sm:$0xff] %vm157, %v145
  %192 = vst.msk [vmem:[#allocation2 + $0x3d] sm:$0xff] %vm157, %v146
  %193 = vst.msk [vmem:[#allocation2 + $0x47] sm:$0xff] %vm157, %v147
  %194 = vst.msk [vmem:[#allocation2 + $0x51] sm:$0xff] %vm157, %v148
  %195 = vst.msk [vmem:[#allocation2 + $0x6f] sm:$0xff] %vm157, %v149
  %196 = vst.msk [vmem:[#allocation2 + $0x79] sm:$0xff] %vm157, %v150
  %197 = vst.msk [vmem:[#allocation2 + $0x83] sm:$0xff] %vm157, %v151
  %198 = vst.msk [vmem:[#allocation2 + $0x8d] sm:$0xff] %vm157, %v152
  %199 = vst.msk [vmem:[#allocation2 + $0x97] sm:$0xff] %vm157, %v153
  %200 = vst.msk [vmem:[#allocation2 + $0xa1] sm:$0xff] %vm157, %v154
  %201 = vst.msk [vmem:[#allocation2 + $0xab] sm:$0xff] %vm157, %v155
  %202 = vst.msk [vmem:[#allocation2 + $0xb5] sm:$0xff] %vm157, %v156
  %v203 = vld [vmem:[#allocation2] sm:$0xff]
  %v204 = vld [vmem:[#allocation2 + $0x8] sm:$0xff]
  %v205 = vld [vmem:[#allocation2 + $0x10] sm:$0xff]
  %v206 = vld [vmem:[#allocation2 + $0x18] sm:$0xff]
  %v207 = vld [vmem:[#allocation2 + $0x20] sm:$0xff]
  %v208 = vld [vmem:[#allocation2 + $0x28] sm:$0xff]
  %v209 = vld [vmem:[#allocation2 + $0x30] sm:$0xff]
  %v210 = vld [vmem:[#allocation2 + $0x38] sm:$0xff]
  %v211 = vld [vmem:[#allocation2 + $0x40] sm:$0xff]
  %v212 = vld [vmem:[#allocation2 + $0x48] sm:$0xff]
  %v213 = vld [vmem:[#allocation2 + $0x50] sm:$0xff]
  %v214 = vld [vmem:[#allocation2 + $0x58] sm:$0xff]
  %v215 = vld [vmem:[#allocation2 + $0x60] sm:$0xff]
  %v216 = vld [vmem:[#allocation2 + $0x68] sm:$0xff]
  %v217 = vld [vmem:[#allocation2 + $0x70] sm:$0xff]
  %v218 = vld [vmem:[#allocation2 + $0x78] sm:$0xff]
  %v219 = vld [vmem:[#allocation2 + $0x80] sm:$0xff]
  %v220 = vld [vmem:[#allocation2 + $0x88] sm:$0xff]
  %v221 = vld [vmem:[#allocation2 + $0x90] sm:$0xff]
  %v222 = vld [vmem:[#allocation2 + $0x98] sm:$0xff]
  %v223 = vld [vmem:[#allocation2 + $0xa0] sm:$0xff]
  %v224 = vld [vmem:[#allocation2 + $0xa8] sm:$0xff]
  %v225 = vld [vmem:[#allocation2 + $0xb0] sm:$0xff]
  %v226 = vld [vmem:[#allocation2 + $0xb8] sm:$0xff]
  %v227 = vld [vmem:[#allocation2 + $0xc0] sm:$0xff]
  %v228 = vld [vmem:[%s1] sm:$0xff]
  %v229 = vld [vmem:[#allocation2 + $0x1] sm:$0xff]
  %v230 = vld [vmem:[#allocation2 + $0x9] sm:$0xff]
  %v231 = vld [vmem:[#allocation2 + $0x11] sm:$0xff]
  %v232 = vld [vmem:[#allocation2 + $0x19] sm:$0xff]
  %v233 = vld [vmem:[#allocation2 + $0x21] sm:$0xff]
  %v234 = vld [vmem:[#allocation2 + $0x29] sm:$0xff]
  %v235 = vld [vmem:[#allocation2 + $0x31] sm:$0xff]
  %v236 = vld [vmem:[#allocation2 + $0x39] sm:$0xff]
  %v237 = vld [vmem:[#allocation2 + $0x41] sm:$0xff]
  %v238 = vld [vmem:[#allocation2 + $0x49] sm:$0xff]
  %v239 = vld [vmem:[#allocation2 + $0x51] sm:$0xff]
  %v240 = vld [vmem:[#allocation2 + $0x59] sm:$0xff]
  %v241 = vld [vmem:[#allocation2 + $0x61] sm:$0xff]
  %v242 = vld [vmem:[#allocation2 + $0x69] sm:$0xff]
  %v243 = vld [vmem:[#allocation2 + $0x71] sm:$0xff]
  %v244 = vld [vmem:[#allocation2 + $0x79] sm:$0xff]
  %v245 = vld [vmem:[#allocation2 + $0x81] sm:$0xff]
  %v246 = vld [vmem:[#allocation2 + $0x89] sm:$0xff]
  %v247 = vld [vmem:[#allocation2 + $0x91] sm:$0xff]
  %v248 = vld [vmem:[#allocation2 + $0x99] sm:$0xff]
  %v249 = vld [vmem:[#allocation2 + $0xa1] sm:$0xff]
  %v250 = vld [vmem:[#allocation2 + $0xa9] sm:$0xff]
  %v251 = vld [vmem:[#allocation2 + $0xb1] sm:$0xff]
  %v252 = vld [vmem:[#allocation2 + $0xb9] sm:$0xff]
  %v253 = vld [vmem:[#allocation2 + $0xc1] sm:$0xff]
  %s254 = scalar_lea.vmem %s1, 8
  %v255 = vld [vmem:[%s254] sm:$0xff]
  %v257 = vsel %vm157, %v255, 0
  %v260 = vsel %vm157, %v229, 0
  %v263 = vsel %vm157, %v230, 0
  %v266 = vsel %vm157, %v231, 0
  %v269 = vsel %vm157, %v232, 0
  %v272 = vsel %vm157, %v233, 0
  %v275 = vsel %vm157, %v234, 0
  %v278 = vsel %vm157, %v235, 0
  %v281 = vsel %vm157, %v236, 0
  %v284 = vsel %vm157, %v237, 0
  %v287 = vsel %vm157, %v238, 0
  %v290 = vsel %vm157, %v239, 0
  %v293 = vsel %vm157, %v240, 0
  %v296 = vsel %vm157, %v241, 0
  %v299 = vsel %vm157, %v242, 0
  %v302 = vsel %vm157, %v243, 0
  %v305 = vsel %vm157, %v244, 0
  %v308 = vsel %vm157, %v245, 0
  %v311 = vsel %vm157, %v246, 0
  %v314 = vsel %vm157, %v247, 0
  %v317 = vsel %vm157, %v248, 0
  %v320 = vsel %vm157, %v249, 0
  %v323 = vsel %vm157, %v250, 0
  %v326 = vsel %vm157, %v251, 0
  %v329 = vsel %vm157, %v252, 0
  %v332 = vsel %vm157, %v253, 0
  %334 = vmatprep.subr.mxu0 0.0
  %335 = vmatpush1.xpose.msra.mxu0 %v260
  %336 = vmatprep.subr.mxu0 0.0
  %337 = vmatpush1.xpose.msra.mxu0 %v263
  %338 = vmatprep.subr.mxu0 0.0
  %339 = vmatpush1.xpose.msra.mxu0 %v266
  %340 = vmatprep.subr.mxu0 0.0
  %341 = vmatpush1.xpose.msra.mxu0 %v269
  %342 = vmatprep.subr.mxu0 0.0
  %343 = vmatpush1.xpose.msra.mxu0 %v272
  %344 = vmatprep.subr.mxu0 0.0
  %345 = vmatpush1.xpose.msra.mxu0 %v275
  %346 = vmatprep.subr.mxu0 0.0
  %347 = vmatpush1.xpose.msra.mxu0 %v278
  %348 = vmatprep.subr.mxu0 0.0
  %349 = vmatpush1.xpose.msra.mxu0 %v281
  %350 = vmatprep.subr.mxu0 0.0
  %351 = vmatpush1.xpose.msra.mxu0 %v284
  %352 = vmatprep.subr.mxu0 0.0
  %353 = vmatpush1.xpose.msra.mxu0 %v287
  %354 = vmatprep.subr.mxu0 0.0
  %355 = vmatpush1.xpose.msra.mxu0 %v290
  %356 = vmatprep.subr.mxu0 0.0
  %357 = vmatpush1.xpose.msra.mxu0 %v293
  %358 = vmatprep.subr.mxu0 0.0
  %359 = vmatpush1.xpose.msra.mxu0 %v296
  %360 = vmatprep.subr.mxu0 0.0
  %361 = vmatpush1.xpose.msra.mxu0 %v299
  %362 = vmatprep.subr.mxu0 0.0
  %363 = vmatpush1.xpose.msra.mxu0 %v302
  %364 = vmatprep.subr.mxu0 0.0
  %365 = vmatpush1.xpose.msra.mxu0 %v305
  %366 = vmatprep.subr.mxu0 0.0
  %367 = vmatpush1.xpose.msra.mxu0 %v308
  %368 = vmatprep.subr.mxu0 0.0
  %369 = vmatpush1.xpose.msra.mxu0 %v311
  %370 = vmatprep.subr.mxu0 0.0
  %371 = vmatpush1.xpose.msra.mxu0 %v314
  %372 = vmatprep.subr.mxu0 0.0
  %373 = vmatpush1.xpose.msra.mxu0 %v317
  %374 = vmatprep.subr.mxu0 0.0
  %375 = vmatpush1.xpose.msra.mxu0 %v320
  %376 = vmatprep.subr.mxu0 0.0
  %377 = vmatpush1.xpose.msra.mxu0 %v323
  %378 = vmatprep.subr.mxu0 0.0
  %379 = vmatpush1.xpose.msra.mxu0 %v326
  %380 = vmatprep.subr.mxu0 0.0
  %381 = vmatpush1.xpose.msra.mxu0 %v329
  %382 = vmatprep.subr.mxu0 0.0
  %383 = vmatpush1.xpose.msra.mxu0 %v332
  %384 = vmatprep.subr.mxu0 0.0
  %385 = vmatpush1.xpose.msra.mxu0 0.0
  %386 = vmatprep.subr.mxu0 0.0
  %387 = vmatpush1.xpose.msra.mxu0 0.0
  %388 = vmatprep.subr.mxu0 0.0
  %389 = vmatpush1.xpose.msra.mxu0 0.0
  %390 = vmatprep.subr.mxu0 0.0
  %391 = vmatpush1.xpose.msra.mxu0 0.0
  %392 = vmatprep.subr.mxu0 0.0
  %393 = vmatpush1.xpose.msra.mxu0 0.0
  %394 = vmatprep.subr.mxu0 0.0
  %395 = vmatpush1.xpose.msra.mxu0 0.0
  %396 = vmatprep.subr.mxu0 0.0
  %397 = vmatpush1.xpose.msra.mxu0 0.0
  %398 = vmatprep.mubr.f32.mxu0 0.0
  %399 = vmatmul.mubr.f32.gmra.mrb[0].mxu0 %v257
  %v400 = vpop.f32.mrb[0].mxu0
  %v401 = vadd.f32 0.0, %v400
  %v402 = vpop.f32.mrb[0].mxu0
  %v403 = vadd.f32 0.0, %v402
  %404 = vdwg.mxu0
  %v406 = vsel %vm157, %v228, 0
  %v409 = vsel %vm157, %v203, 0
  %v412 = vsel %vm157, %v204, 0
  %v415 = vsel %vm157, %v205, 0
  %v418 = vsel %vm157, %v206, 0
  %v421 = vsel %vm157, %v207, 0
  %v424 = vsel %vm157, %v208, 0
  %v427 = vsel %vm157, %v209, 0
  %v430 = vsel %vm157, %v210, 0
  %v433 = vsel %vm157, %v211, 0
  %v436 = vsel %vm157, %v212, 0
  %v439 = vsel %vm157, %v213, 0
  %v442 = vsel %vm157, %v214, 0
  %v445 = vsel %vm157, %v215, 0
  %v448 = vsel %vm157, %v216, 0
  %v451 = vsel %vm157, %v217, 0
  %v454 = vsel %vm157, %v218, 0
  %v457 = vsel %vm157, %v219, 0
  %v460 = vsel %vm157, %v220, 0
  %v463 = vsel %vm157, %v221, 0
  %v466 = vsel %vm157, %v222, 0
  %v469 = vsel %vm157, %v223, 0
  %v472 = vsel %vm157, %v224, 0
  %v475 = vsel %vm157, %v225, 0
  %v478 = vsel %vm157, %v226, 0
  %v481 = vsel %vm157, %v227, 0
  %483 = vmatprep.subr.mxu0 0.0
  %484 = vmatpush1.xpose.msra.mxu0 %v409
  %485 = vmatprep.subr.mxu0 0.0
  %486 = vmatpush1.xpose.msra.mxu0 %v412
  %487 = vmatprep.subr.mxu0 0.0
  %488 = vmatpush1.xpose.msra.mxu0 %v415
  %489 = vmatprep.subr.mxu0 0.0
  %490 = vmatpush1.xpose.msra.mxu0 %v418
  %491 = vmatprep.subr.mxu0 0.0
  %492 = vmatpush1.xpose.msra.mxu0 %v421
  %493 = vmatprep.subr.mxu0 0.0
  %494 = vmatpush1.xpose.msra.mxu0 %v424
  %495 = vmatprep.subr.mxu0 0.0
  %496 = vmatpush1.xpose.msra.mxu0 %v427
  %497 = vmatprep.subr.mxu0 0.0
  %498 = vmatpush1.xpose.msra.mxu0 %v430
  %499 = vmatprep.subr.mxu0 0.0
  %500 = vmatpush1.xpose.msra.mxu0 %v433
  %501 = vmatprep.subr.mxu0 0.0
  %502 = vmatpush1.xpose.msra.mxu0 %v436
  %503 = vmatprep.subr.mxu0 0.0
  %504 = vmatpush1.xpose.msra.mxu0 %v439
  %505 = vmatprep.subr.mxu0 0.0
  %506 = vmatpush1.xpose.msra.mxu0 %v442
  %507 = vmatprep.subr.mxu0 0.0
  %508 = vmatpush1.xpose.msra.mxu0 %v445
  %509 = vmatprep.subr.mxu0 0.0
  %510 = vmatpush1.xpose.msra.mxu0 %v448
  %511 = vmatprep.subr.mxu0 0.0
  %512 = vmatpush1.xpose.msra.mxu0 %v451
  %513 = vmatprep.subr.mxu0 0.0
  %514 = vmatpush1.xpose.msra.mxu0 %v454
  %515 = vmatprep.subr.mxu0 0.0
  %516 = vmatpush1.xpose.msra.mxu0 %v457
  %517 = vmatprep.subr.mxu0 0.0
  %518 = vmatpush1.xpose.msra.mxu0 %v460
  %519 = vmatprep.subr.mxu0 0.0
  %520 = vmatpush1.xpose.msra.mxu0 %v463
  %521 = vmatprep.subr.mxu0 0.0
  %522 = vmatpush1.xpose.msra.mxu0 %v466
  %523 = vmatprep.subr.mxu0 0.0
  %524 = vmatpush1.xpose.msra.mxu0 %v469
  %525 = vmatprep.subr.mxu0 0.0
  %526 = vmatpush1.xpose.msra.mxu0 %v472
  %527 = vmatprep.subr.mxu0 0.0
  %528 = vmatpush1.xpose.msra.mxu0 %v475
  %529 = vmatprep.subr.mxu0 0.0
  %530 = vmatpush1.xpose.msra.mxu0 %v478
  %531 = vmatprep.subr.mxu0 0.0
  %532 = vmatpush1.xpose.msra.mxu0 %v481
  %533 = vmatprep.subr.mxu0 0.0
  %534 = vmatpush1.xpose.msra.mxu0 0.0
  %535 = vmatprep.subr.mxu0 0.0
  %536 = vmatpush1.xpose.msra.mxu0 0.0
  %537 = vmatprep.subr.mxu0 0.0
  %538 = vmatpush1.xpose.msra.mxu0 0.0
  %539 = vmatprep.subr.mxu0 0.0
  %540 = vmatpush1.xpose.msra.mxu0 0.0
  %541 = vmatprep.subr.mxu0 0.0
  %542 = vmatpush1.xpose.msra.mxu0 0.0
  %543 = vmatprep.subr.mxu0 0.0
  %544 = vmatpush1.xpose.msra.mxu0 0.0
  %545 = vmatprep.subr.mxu0 0.0
  %546 = vmatpush1.xpose.msra.mxu0 0.0
  %547 = vmatprep.mubr.f32.mxu0 0.0
  %548 = vmatmul.mubr.f32.gmra.mrb[0].mxu0 %v406
  %v549 = vpop.f32.mrb[0].mxu0
  %v550 = vadd.f32 %v401, %v549
  %v551 = vpop.f32.mrb[0].mxu0
  %v552 = vadd.f32 %v403, %v551
  %553 = vdwg.mxu0
  %v554 = vld [vmem:[#allocation2 + $0x2] sm:$0xff]
  %v555 = vld [vmem:[#allocation2 + $0xa] sm:$0xff]
  %v556 = vld [vmem:[#allocation2 + $0x12] sm:$0xff]
  %v557 = vld [vmem:[#allocation2 + $0x1a] sm:$0xff]
  %v558 = vld [vmem:[#allocation2 + $0x22] sm:$0xff]
  %v559 = vld [vmem:[#allocation2 + $0x2a] sm:$0xff]
  %v560 = vld [vmem:[#allocation2 + $0x32] sm:$0xff]
  %v561 = vld [vmem:[#allocation2 + $0x3a] sm:$0xff]
  %v562 = vld [vmem:[#allocation2 + $0x42] sm:$0xff]
  %v563 = vld [vmem:[#allocation2 + $0x4a] sm:$0xff]
  %v564 = vld [vmem:[#allocation2 + $0x52] sm:$0xff]
  %v565 = vld [vmem:[#allocation2 + $0x5a] sm:$0xff]
  %v566 = vld [vmem:[#allocation2 + $0x62] sm:$0xff]
  %v567 = vld [vmem:[#allocation2 + $0x6a] sm:$0xff]
  %v568 = vld [vmem:[#allocation2 + $0x72] sm:$0xff]
  %v569 = vld [vmem:[#allocation2 + $0x7a] sm:$0xff]
  %v570 = vld [vmem:[#allocation2 + $0x82] sm:$0xff]
  %v571 = vld [vmem:[#allocation2 + $0x8a] sm:$0xff]
  %v572 = vld [vmem:[#allocation2 + $0x92] sm:$0xff]
  %v573 = vld [vmem:[#allocation2 + $0x9a] sm:$0xff]
  %v574 = vld [vmem:[#allocation2 + $0xa2] sm:$0xff]
  %v575 = vld [vmem:[#allocation2 + $0xaa] sm:$0xff]
  %v576 = vld [vmem:[#allocation2 + $0xb2] sm:$0xff]
  %v577 = vld [vmem:[#allocation2 + $0xba] sm:$0xff]
  %v578 = vld [vmem:[#allocation2 + $0xc2] sm:$0xff]
  %s579 = scalar_lea.vmem %s1, 16
  %v580 = vld [vmem:[%s579] sm:$0xff]
  %v582 = vsel %vm157, %v580, 0
  %v585 = vsel %vm157, %v554, 0
  %v588 = vsel %vm157, %v555, 0
  %v591 = vsel %vm157, %v556, 0
  %v594 = vsel %vm157, %v557, 0
  %v597 = vsel %vm157, %v558, 0
  %v600 = vsel %vm157, %v559, 0
  %v603 = vsel %vm157, %v560, 0
  %v606 = vsel %vm157, %v561, 0
  %v609 = vsel %vm157, %v562, 0
  %v612 = vsel %vm157, %v563, 0
  %v615 = vsel %vm157, %v564, 0
  %v618 = vsel %vm157, %v565, 0
  %v621 = vsel %vm157, %v566, 0
  %v624 = vsel %vm157, %v567, 0
  %v627 = vsel %vm157, %v568, 0
  %v630 = vsel %vm157, %v569, 0
  %v633 = vsel %vm157, %v570, 0
  %v636 = vsel %vm157, %v571, 0
  %v639 = vsel %vm157, %v572, 0
  %v642 = vsel %vm157, %v573, 0
  %v645 = vsel %vm157, %v574, 0
  %v648 = vsel %vm157, %v575, 0
  %v651 = vsel %vm157, %v576, 0
  %v654 = vsel %vm157, %v577, 0
  %v657 = vsel %vm157, %v578, 0
  %659 = vmatprep.subr.mxu0 0.0
  %660 = vmatpush1.xpose.msra.mxu0 %v585
  %661 = vmatprep.subr.mxu0 0.0
  %662 = vmatpush1.xpose.msra.mxu0 %v588
  %663 = vmatprep.subr.mxu0 0.0
  %664 = vmatpush1.xpose.msra.mxu0 %v591
  %665 = vmatprep.subr.mxu0 0.0
  %666 = vmatpush1.xpose.msra.mxu0 %v594
  %667 = vmatprep.subr.mxu0 0.0
  %668 = vmatpush1.xpose.msra.mxu0 %v597
  %669 = vmatprep.subr.mxu0 0.0
  %670 = vmatpush1.xpose.msra.mxu0 %v600
  %671 = vmatprep.subr.mxu0 0.0
  %672 = vmatpush1.xpose.msra.mxu0 %v603
  %673 = vmatprep.subr.mxu0 0.0
  %674 = vmatpush1.xpose.msra.mxu0 %v606
  %675 = vmatprep.subr.mxu0 0.0
  %676 = vmatpush1.xpose.msra.mxu0 %v609
  %677 = vmatprep.subr.mxu0 0.0
  %678 = vmatpush1.xpose.msra.mxu0 %v612
  %679 = vmatprep.subr.mxu0 0.0
  %680 = vmatpush1.xpose.msra.mxu0 %v615
  %681 = vmatprep.subr.mxu0 0.0
  %682 = vmatpush1.xpose.msra.mxu0 %v618
  %683 = vmatprep.subr.mxu0 0.0
  %684 = vmatpush1.xpose.msra.mxu0 %v621
  %685 = vmatprep.subr.mxu0 0.0
  %686 = vmatpush1.xpose.msra.mxu0 %v624
  %687 = vmatprep.subr.mxu0 0.0
  %688 = vmatpush1.xpose.msra.mxu0 %v627
  %689 = vmatprep.subr.mxu0 0.0
  %690 = vmatpush1.xpose.msra.mxu0 %v630
  %691 = vmatprep.subr.mxu0 0.0
  %692 = vmatpush1.xpose.msra.mxu0 %v633
  %693 = vmatprep.subr.mxu0 0.0
  %694 = vmatpush1.xpose.msra.mxu0 %v636
  %695 = vmatprep.subr.mxu0 0.0
  %696 = vmatpush1.xpose.msra.mxu0 %v639
  %697 = vmatprep.subr.mxu0 0.0
  %698 = vmatpush1.xpose.msra.mxu0 %v642
  %699 = vmatprep.subr.mxu0 0.0
  %700 = vmatpush1.xpose.msra.mxu0 %v645
  %701 = vmatprep.subr.mxu0 0.0
  %702 = vmatpush1.xpose.msra.mxu0 %v648
  %703 = vmatprep.subr.mxu0 0.0
  %704 = vmatpush1.xpose.msra.mxu0 %v651
  %705 = vmatprep.subr.mxu0 0.0
  %706 = vmatpush1.xpose.msra.mxu0 %v654
  %707 = vmatprep.subr.mxu0 0.0
  %708 = vmatpush1.xpose.msra.mxu0 %v657
  %709 = vmatprep.subr.mxu0 0.0
  %710 = vmatpush1.xpose.msra.mxu0 0.0
  %711 = vmatprep.subr.mxu0 0.0
  %712 = vmatpush1.xpose.msra.mxu0 0.0
  %713 = vmatprep.subr.mxu0 0.0
  %714 = vmatpush1.xpose.msra.mxu0 0.0
  %715 = vmatprep.subr.mxu0 0.0
  %716 = vmatpush1.xpose.msra.mxu0 0.0
  %717 = vmatprep.subr.mxu0 0.0
  %718 = vmatpush1.xpose.msra.mxu0 0.0
  %719 = vmatprep.subr.mxu0 0.0
  %720 = vmatpush1.xpose.msra.mxu0 0.0
  %721 = vmatprep.subr.mxu0 0.0
  %722 = vmatpush1.xpose.msra.mxu0 0.0
  %723 = vmatprep.mubr.f32.mxu0 0.0
  %724 = vmatmul.mubr.f32.gmra.mrb[0].mxu0 %v582
  %v725 = vpop.f32.mrb[0].mxu0
  %v726 = vadd.f32 0.0, %v725
  %v727 = vpop.f32.mrb[0].mxu0
  %v728 = vadd.f32 0.0, %v727
  %729 = vdwg.mxu0
  %v730 = vadd.f32 %v550, %v726
  %v731 = vadd.f32 %v552, %v728
  %v732 = vld [vmem:[#allocation2 + $0xa] sm:$0xff]
  %v733 = vld [vmem:[#allocation2 + $0x12] sm:$0xff]
  %v734 = vld [vmem:[#allocation2 + $0x1a] sm:$0xff]
  %v735 = vld [vmem:[#allocation2 + $0x22] sm:$0xff]
  %v736 = vld [vmem:[#allocation2 + $0x2a] sm:$0xff]
  %v737 = vld [vmem:[#allocation2 + $0x32] sm:$0xff]
  %v738 = vld [vmem:[#allocation2 + $0x3a] sm:$0xff]
  %v739 = vld [vmem:[#allocation2 + $0x42] sm:$0xff]
  %v740 = vld [vmem:[#allocation2 + $0x4a] sm:$0xff]
  %v741 = vld [vmem:[#allocation2 + $0x52] sm:$0xff]
  %v742 = vld [vmem:[#allocation2 + $0x5a] sm:$0xff]
  %v743 = vld [vmem:[#allocation2 + $0x62] sm:$0xff]
  %v744 = vld [vmem:[#allocation2 + $0x6a] sm:$0xff]
  %v745 = vld [vmem:[#allocation2 + $0x72] sm:$0xff]
  %v746 = vld [vmem:[#allocation2 + $0x7a] sm:$0xff]
  %v747 = vld [vmem:[#allocation2 + $0x82] sm:$0xff]
  %v748 = vld [vmem:[#allocation2 + $0x8a] sm:$0xff]
  %v749 = vld [vmem:[#allocation2 + $0x92] sm:$0xff]
  %v750 = vld [vmem:[#allocation2 + $0x9a] sm:$0xff]
  %v751 = vld [vmem:[#allocation2 + $0xa2] sm:$0xff]
  %v752 = vld [vmem:[#allocation2 + $0xaa] sm:$0xff]
  %v753 = vld [vmem:[#allocation2 + $0xb2] sm:$0xff]
  %v754 = vld [vmem:[#allocation2 + $0xba] sm:$0xff]
  %v755 = vld [vmem:[#allocation2 + $0xc2] sm:$0xff]
  %v756 = vld [vmem:[#allocation2 + $0xca] sm:$0xff]
  %s757 = scalar_lea.vmem %s1, 24
  %v758 = vld [vmem:[%s757] sm:$0xff]
  %v760 = vsel %vm157, %v758, 0
  %v763 = vsel %vm157, %v732, 0
  %v766 = vsel %vm157, %v733, 0
  %v769 = vsel %vm157, %v734, 0
  %v772 = vsel %vm157, %v735, 0
  %v775 = vsel %vm157, %v736, 0
  %v778 = vsel %vm157, %v737, 0
  %v781 = vsel %vm157, %v738, 0
  %v784 = vsel %vm157, %v739, 0
  %v787 = vsel %vm157, %v740, 0
  %v790 = vsel %vm157, %v741, 0
  %v793 = vsel %vm157, %v742, 0
  %v796 = vsel %vm157, %v743, 0
  %v799 = vsel %vm157, %v744, 0
  %v802 = vsel %vm157, %v745, 0
  %v805 = vsel %vm157, %v746, 0
  %v808 = vsel %vm157, %v747, 0
  %v811 = vsel %vm157, %v748, 0
  %v814 = vsel %vm157, %v749, 0
  %v817 = vsel %vm157, %v750, 0
  %v820 = vsel %vm157, %v751, 0
  %v823 = vsel %vm157, %v752, 0
  %v826 = vsel %vm157, %v753, 0
  %v829 = vsel %vm157, %v754, 0
  %v832 = vsel %vm157, %v755, 0
  %v835 = vsel %vm157, %v756, 0
  %837 = vmatprep.subr.mxu0 0.0
  %838 = vmatpush1.xpose.msra.mxu0 %v763
  %839 = vmatprep.subr.mxu0 0.0
  %840 = vmatpush1.xpose.msra.mxu0 %v766
  %841 = vmatprep.subr.mxu0 0.0
  %842 = vmatpush1.xpose.msra.mxu0 %v769
  %843 = vmatprep.subr.mxu0 0.0
  %844 = vmatpush1.xpose.msra.mxu0 %v772
  %845 = vmatprep.subr.mxu0 0.0
  %846 = vmatpush1.xpose.msra.mxu0 %v775
  %847 = vmatprep.subr.mxu0 0.0
  %848 = vmatpush1.xpose.msra.mxu0 %v778
  %849 = vmatprep.subr.mxu0 0.0
  %850 = vmatpush1.xpose.msra.mxu0 %v781
  %851 = vmatprep.subr.mxu0 0.0
  %852 = vmatpush1.xpose.msra.mxu0 %v784
  %853 = vmatprep.subr.mxu0 0.0
  %854 = vmatpush1.xpose.msra.mxu0 %v787
  %855 = vmatprep.subr.mxu0 0.0
  %856 = vmatpush1.xpose.msra.mxu0 %v790
  %857 = vmatprep.subr.mxu0 0.0
  %858 = vmatpush1.xpose.msra.mxu0 %v793
  %859 = vmatprep.subr.mxu0 0.0
  %860 = vmatpush1.xpose.msra.mxu0 %v796
  %861 = vmatprep.subr.mxu0 0.0
  %862 = vmatpush1.xpose.msra.mxu0 %v799
  %863 = vmatprep.subr.mxu0 0.0
  %864 = vmatpush1.xpose.msra.mxu0 %v802
  %865 = vmatprep.subr.mxu0 0.0
  %866 = vmatpush1.xpose.msra.mxu0 %v805
  %867 = vmatprep.subr.mxu0 0.0
  %868 = vmatpush1.xpose.msra.mxu0 %v808
  %869 = vmatprep.subr.mxu0 0.0
  %870 = vmatpush1.xpose.msra.mxu0 %v811
  %871 = vmatprep.subr.mxu0 0.0
  %872 = vmatpush1.xpose.msra.mxu0 %v814
  %873 = vmatprep.subr.mxu0 0.0
  %874 = vmatpush1.xpose.msra.mxu0 %v817
  %875 = vmatprep.subr.mxu0 0.0
  %876 = vmatpush1.xpose.msra.mxu0 %v820
  %877 = vmatprep.subr.mxu0 0.0
  %878 = vmatpush1.xpose.msra.mxu0 %v823
  %879 = vmatprep.subr.mxu0 0.0
  %880 = vmatpush1.xpose.msra.mxu0 %v826
  %881 = vmatprep.subr.mxu0 0.0
  %882 = vmatpush1.xpose.msra.mxu0 %v829
  %883 = vmatprep.subr.mxu0 0.0
  %884 = vmatpush1.xpose.msra.mxu0 %v832
  %885 = vmatprep.subr.mxu0 0.0
  %886 = vmatpush1.xpose.msra.mxu0 %v835
  %887 = vmatprep.subr.mxu0 0.0
  %888 = vmatpush1.xpose.msra.mxu0 0.0
  %889 = vmatprep.subr.mxu0 0.0
  %890 = vmatpush1.xpose.msra.mxu0 0.0
  %891 = vmatprep.subr.mxu0 0.0
  %892 = vmatpush1.xpose.msra.mxu0 0.0
  %893 = vmatprep.subr.mxu0 0.0
  %894 = vmatpush1.xpose.msra.mxu0 0.0
  %895 = vmatprep.subr.mxu0 0.0
  %896 = vmatpush1.xpose.msra.mxu0 0.0
  %897 = vmatprep.subr.mxu0 0.0
  %898 = vmatpush1.xpose.msra.mxu0 0.0
  %899 = vmatprep.subr.mxu0 0.0
  %900 = vmatpush1.xpose.msra.mxu0 0.0
  %901 = vmatprep.mubr.f32.mxu0 0.0
  %902 = vmatmul.mubr.f32.gmra.mrb[0].mxu0 %v760
  %v903 = vpop.f32.mrb[0].mxu0
  %v904 = vadd.f32 0.0, %v903
  %v905 = vpop.f32.mrb[0].mxu0
  %v906 = vadd.f32 0.0, %v905
  %907 = vdwg.mxu0
  %v908 = vadd.f32 %v730, %v904
  %v909 = vadd.f32 %v731, %v906
  %v910 = vld [vmem:[#allocation2 + $0xb] sm:$0xff]
  %v911 = vld [vmem:[#allocation2 + $0x13] sm:$0xff]
  %v912 = vld [vmem:[#allocation2 + $0x1b] sm:$0xff]
  %v913 = vld [vmem:[#allocation2 + $0x23] sm:$0xff]
  %v914 = vld [vmem:[#allocation2 + $0x2b] sm:$0xff]
  %v915 = vld [vmem:[#allocation2 + $0x33] sm:$0xff]
  %v916 = vld [vmem:[#allocation2 + $0x3b] sm:$0xff]
  %v917 = vld [vmem:[#allocation2 + $0x43] sm:$0xff]
  %v918 = vld [vmem:[#allocation2 + $0x4b] sm:$0xff]
  %v919 = vld [vmem:[#allocation2 + $0x53] sm:$0xff]
  %v920 = vld [vmem:[#allocation2 + $0x5b] sm:$0xff]
  %v921 = vld [vmem:[#allocation2 + $0x63] sm:$0xff]
  %v922 = vld [vmem:[#allocation2 + $0x6b] sm:$0xff]
  %v923 = vld [vmem:[#allocation2 + $0x73] sm:$0xff]
  %v924 = vld [vmem:[#allocation2 + $0x7b] sm:$0xff]
  %v925 = vld [vmem:[#allocation2 + $0x83] sm:$0xff]
  %v926 = vld [vmem:[#allocation2 + $0x8b] sm:$0xff]
  %v927 = vld [vmem:[#allocation2 + $0x93] sm:$0xff]
  %v928 = vld [vmem:[#allocation2 + $0x9b] sm:$0xff]
  %v929 = vld [vmem:[#allocation2 + $0xa3] sm:$0xff]
  %v930 = vld [vmem:[#allocation2 + $0xab] sm:$0xff]
  %v931 = vld [vmem:[#allocation2 + $0xb3] sm:$0xff]
  %v932 = vld [vmem:[#allocation2 + $0xbb] sm:$0xff]
  %v933 = vld [vmem:[#allocation2 + $0xc3] sm:$0xff]
  %v934 = vld [vmem:[#allocation2 + $0xcb] sm:$0xff]
  %s935 = scalar_lea.vmem %s1, 32
  %v936 = vld [vmem:[%s935] sm:$0xff]
  %v938 = vsel %vm157, %v936, 0
  %v941 = vsel %vm157, %v910, 0
  %v944 = vsel %vm157, %v911, 0
  %v947 = vsel %vm157, %v912, 0
  %v950 = vsel %vm157, %v913, 0
  %v953 = vsel %vm157, %v914, 0
  %v956 = vsel %vm157, %v915, 0
  %v959 = vsel %vm157, %v916, 0
  %v962 = vsel %vm157, %v917, 0
  %v965 = vsel %vm157, %v918, 0
  %v968 = vsel %vm157, %v919, 0
  %v971 = vsel %vm157, %v920, 0
  %v974 = vsel %vm157, %v921, 0
  %v977 = vsel %vm157, %v922, 0
  %v980 = vsel %vm157, %v923, 0
  %v983 = vsel %vm157, %v924, 0
  %v986 = vsel %vm157, %v925, 0
  %v989 = vsel %vm157, %v926, 0
  %v992 = vsel %vm157, %v927, 0
  %v995 = vsel %vm157, %v928, 0
  %v998 = vsel %vm157, %v929, 0
  %v1001 = vsel %vm157, %v930, 0
  %v1004 = vsel %vm157, %v931, 0
  %v1007 = vsel %vm157, %v932, 0
  %v1010 = vsel %vm157, %v933, 0
  %v1013 = vsel %vm157, %v934, 0
  %1015 = vmatprep.subr.mxu0 0.0
  %1016 = vmatpush1.xpose.msra.mxu0 %v941
  %1017 = vmatprep.subr.mxu0 0.0
  %1018 = vmatpush1.xpose.msra.mxu0 %v944
  %1019 = vmatprep.subr.mxu0 0.0
  %1020 = vmatpush1.xpose.msra.mxu0 %v947
  %1021 = vmatprep.subr.mxu0 0.0
  %1022 = vmatpush1.xpose.msra.mxu0 %v950
  %1023 = vmatprep.subr.mxu0 0.0
  %1024 = vmatpush1.xpose.msra.mxu0 %v953
  %1025 = vmatprep.subr.mxu0 0.0
  %1026 = vmatpush1.xpose.msra.mxu0 %v956
  %1027 = vmatprep.subr.mxu0 0.0
  %1028 = vmatpush1.xpose.msra.mxu0 %v959
  %1029 = vmatprep.subr.mxu0 0.0
  %1030 = vmatpush1.xpose.msra.mxu0 %v962
  %1031 = vmatprep.subr.mxu0 0.0
  %1032 = vmatpush1.xpose.msra.mxu0 %v965
  %1033 = vmatprep.subr.mxu0 0.0
  %1034 = vmatpush1.xpose.msra.mxu0 %v968
  %1035 = vmatprep.subr.mxu0 0.0
  %1036 = vmatpush1.xpose.msra.mxu0 %v971
  %1037 = vmatprep.subr.mxu0 0.0
  %1038 = vmatpush1.xpose.msra.mxu0 %v974
  %1039 = vmatprep.subr.mxu0 0.0
  %1040 = vmatpush1.xpose.msra.mxu0 %v977
  %1041 = vmatprep.subr.mxu0 0.0
  %1042 = vmatpush1.xpose.msra.mxu0 %v980
  %1043 = vmatprep.subr.mxu0 0.0
  %1044 = vmatpush1.xpose.msra.mxu0 %v983
  %1045 = vmatprep.subr.mxu0 0.0
  %1046 = vmatpush1.xpose.msra.mxu0 %v986
  %1047 = vmatprep.subr.mxu0 0.0
  %1048 = vmatpush1.xpose.msra.mxu0 %v989
  %1049 = vmatprep.subr.mxu0 0.0
  %1050 = vmatpush1.xpose.msra.mxu0 %v992
  %1051 = vmatprep.subr.mxu0 0.0
  %1052 = vmatpush1.xpose.msra.mxu0 %v995
  %1053 = vmatprep.subr.mxu0 0.0
  %1054 = vmatpush1.xpose.msra.mxu0 %v998
  %1055 = vmatprep.subr.mxu0 0.0
  %1056 = vmatpush1.xpose.msra.mxu0 %v1001
  %1057 = vmatprep.subr.mxu0 0.0
  %1058 = vmatpush1.xpose.msra.mxu0 %v1004
  %1059 = vmatprep.subr.mxu0 0.0
  %1060 = vmatpush1.xpose.msra.mxu0 %v1007
  %1061 = vmatprep.subr.mxu0 0.0
  %1062 = vmatpush1.xpose.msra.mxu0 %v1010
  %1063 = vmatprep.subr.mxu0 0.0
  %1064 = vmatpush1.xpose.msra.mxu0 %v1013
  %1065 = vmatprep.subr.mxu0 0.0
  %1066 = vmatpush1.xpose.msra.mxu0 0.0
  %1067 = vmatprep.subr.mxu0 0.0
  %1068 = vmatpush1.xpose.msra.mxu0 0.0
  %1069 = vmatprep.subr.mxu0 0.0
  %1070 = vmatpush1.xpose.msra.mxu0 0.0
  %1071 = vmatprep.subr.mxu0 0.0
  %1072 = vmatpush1.xpose.msra.mxu0 0.0
  %1073 = vmatprep.subr.mxu0 0.0
  %1074 = vmatpush1.xpose.msra.mxu0 0.0
  %1075 = vmatprep.subr.mxu0 0.0
  %1076 = vmatpush1.xpose.msra.mxu0 0.0
  %1077 = vmatprep.subr.mxu0 0.0
  %1078 = vmatpush1.xpose.msra.mxu0 0.0
  %1079 = vmatprep.mubr.f32.mxu0 0.0
  %1080 = vmatmul.mubr.f32.gmra.mrb[0].mxu0 %v938
  %v1081 = vpop.f32.mrb[0].mxu0
  %v1082 = vadd.f32 0.0, %v1081
  %v1083 = vpop.f32.mrb[0].mxu0
  %v1084 = vadd.f32 0.0, %v1083
  %1085 = vdwg.mxu0
  %v1086 = vadd.f32 %v908, %v1082
  %v1087 = vadd.f32 %v909, %v1084
  %v1088 = vld [vmem:[#allocation2 + $0xc] sm:$0xff]
  %v1089 = vld [vmem:[#allocation2 + $0x14] sm:$0xff]
  %v1090 = vld [vmem:[#allocation2 + $0x1c] sm:$0xff]
  %v1091 = vld [vmem:[#allocation2 + $0x24] sm:$0xff]
  %v1092 = vld [vmem:[#allocation2 + $0x2c] sm:$0xff]
  %v1093 = vld [vmem:[#allocation2 + $0x34] sm:$0xff]
  %v1094 = vld [vmem:[#allocation2 + $0x3c] sm:$0xff]
  %v1095 = vld [vmem:[#allocation2 + $0x44] sm:$0xff]
  %v1096 = vld [vmem:[#allocation2 + $0x4c] sm:$0xff]
  %v1097 = vld [vmem:[#allocation2 + $0x54] sm:$0xff]
  %v1098 = vld [vmem:[#allocation2 + $0x5c] sm:$0xff]
  %v1099 = vld [vmem:[#allocation2 + $0x64] sm:$0xff]
  %v1100 = vld [vmem:[#allocation2 + $0x6c] sm:$0xff]
  %v1101 = vld [vmem:[#allocation2 + $0x74] sm:$0xff]
  %v1102 = vld [vmem:[#allocation2 + $0x7c] sm:$0xff]
  %v1103 = vld [vmem:[#allocation2 + $0x84] sm:$0xff]
  %v1104 = vld [vmem:[#allocation2 + $0x8c] sm:$0xff]
  %v1105 = vld [vmem:[#allocation2 + $0x94] sm:$0xff]
  %v1106 = vld [vmem:[#allocation2 + $0x9c] sm:$0xff]
  %v1107 = vld [vmem:[#allocation2 + $0xa4] sm:$0xff]
  %v1108 = vld [vmem:[#allocation2 + $0xac] sm:$0xff]
  %v1109 = vld [vmem:[#allocation2 + $0xb4] sm:$0xff]
  %v1110 = vld [vmem:[#allocation2 + $0xbc] sm:$0xff]
  %v1111 = vld [vmem:[#allocation2 + $0xc4] sm:$0xff]
  %v1112 = vld [vmem:[#allocation2 + $0xcc] sm:$0xff]
  %s1113 = scalar_lea.vmem %s1, 40
  %v1114 = vld [vmem:[%s1113] sm:$0xff]
  %v1116 = vsel %vm157, %v1114, 0
  %v1119 = vsel %vm157, %v1088, 0
  %v1122 = vsel %vm157, %v1089, 0
  %v1125 = vsel %vm157, %v1090, 0
  %v1128 = vsel %vm157, %v1091, 0
  %v1131 = vsel %vm157, %v1092, 0
  %v1134 = vsel %vm157, %v1093, 0
  %v1137 = vsel %vm157, %v1094, 0
  %v1140 = vsel %vm157, %v1095, 0
  %v1143 = vsel %vm157, %v1096, 0
  %v1146 = vsel %vm157, %v1097, 0
  %v1149 = vsel %vm157, %v1098, 0
  %v1152 = vsel %vm157, %v1099, 0
  %v1155 = vsel %vm157, %v1100, 0
  %v1158 = vsel %vm157, %v1101, 0
  %v1161 = vsel %vm157, %v1102, 0
  %v1164 = vsel %vm157, %v1103, 0
  %v1167 = vsel %vm157, %v1104, 0
  %v1170 = vsel %vm157, %v1105, 0
  %v1173 = vsel %vm157, %v1106, 0
  %v1176 = vsel %vm157, %v1107, 0
  %v1179 = vsel %vm157, %v1108, 0
  %v1182 = vsel %vm157, %v1109, 0
  %v1185 = vsel %vm157, %v1110, 0
  %v1188 = vsel %vm157, %v1111, 0
  %v1191 = vsel %vm157, %v1112, 0
  %1193 = vmatprep.subr.mxu0 0.0
  %1194 = vmatpush1.xpose.msra.mxu0 %v1119
  %1195 = vmatprep.subr.mxu0 0.0
  %1196 = vmatpush1.xpose.msra.mxu0 %v1122
  %1197 = vmatprep.subr.mxu0 0.0
  %1198 = vmatpush1.xpose.msra.mxu0 %v1125
  %1199 = vmatprep.subr.mxu0 0.0
  %1200 = vmatpush1.xpose.msra.mxu0 %v1128
  %1201 = vmatprep.subr.mxu0 0.0
  %1202 = vmatpush1.xpose.msra.mxu0 %v1131
  %1203 = vmatprep.subr.mxu0 0.0
  %1204 = vmatpush1.xpose.msra.mxu0 %v1134
  %1205 = vmatprep.subr.mxu0 0.0
  %1206 = vmatpush1.xpose.msra.mxu0 %v1137
  %1207 = vmatprep.subr.mxu0 0.0
  %1208 = vmatpush1.xpose.msra.mxu0 %v1140
  %1209 = vmatprep.subr.mxu0 0.0
  %1210 = vmatpush1.xpose.msra.mxu0 %v1143
  %1211 = vmatprep.subr.mxu0 0.0
  %1212 = vmatpush1.xpose.msra.mxu0 %v1146
  %1213 = vmatprep.subr.mxu0 0.0
  %1214 = vmatpush1.xpose.msra.mxu0 %v1149
  %1215 = vmatprep.subr.mxu0 0.0
  %1216 = vmatpush1.xpose.msra.mxu0 %v1152
  %1217 = vmatprep.subr.mxu0 0.0
  %1218 = vmatpush1.xpose.msra.mxu0 %v1155
  %1219 = vmatprep.subr.mxu0 0.0
  %1220 = vmatpush1.xpose.msra.mxu0 %v1158
  %1221 = vmatprep.subr.mxu0 0.0
  %1222 = vmatpush1.xpose.msra.mxu0 %v1161
  %1223 = vmatprep.subr.mxu0 0.0
  %1224 = vmatpush1.xpose.msra.mxu0 %v1164
  %1225 = vmatprep.subr.mxu0 0.0
  %1226 = vmatpush1.xpose.msra.mxu0 %v1167
  %1227 = vmatprep.subr.mxu0 0.0
  %1228 = vmatpush1.xpose.msra.mxu0 %v1170
  %1229 = vmatprep.subr.mxu0 0.0
  %1230 = vmatpush1.xpose.msra.mxu0 %v1173
  %1231 = vmatprep.subr.mxu0 0.0
  %1232 = vmatpush1.xpose.msra.mxu0 %v1176
  %1233 = vmatprep.subr.mxu0 0.0
  %1234 = vmatpush1.xpose.msra.mxu0 %v1179
  %1235 = vmatprep.subr.mxu0 0.0
  %1236 = vmatpush1.xpose.msra.mxu0 %v1182
  %1237 = vmatprep.subr.mxu0 0.0
  %1238 = vmatpush1.xpose.msra.mxu0 %v1185
  %1239 = vmatprep.subr.mxu0 0.0
  %1240 = vmatpush1.xpose.msra.mxu0 %v1188
  %1241 = vmatprep.subr.mxu0 0.0
  %1242 = vmatpush1.xpose.msra.mxu0 %v1191
  %1243 = vmatprep.subr.mxu0 0.0
  %1244 = vmatpush1.xpose.msra.mxu0 0.0
  %1245 = vmatprep.subr.mxu0 0.0
  %1246 = vmatpush1.xpose.msra.mxu0 0.0
  %1247 = vmatprep.subr.mxu0 0.0
  %1248 = vmatpush1.xpose.msra.mxu0 0.0
  %1249 = vmatprep.subr.mxu0 0.0
  %1250 = vmatpush1.xpose.msra.mxu0 0.0
  %1251 = vmatprep.subr.mxu0 0.0
  %1252 = vmatpush1.xpose.msra.mxu0 0.0
  %1253 = vmatprep.subr.mxu0 0.0
  %1254 = vmatpush1.xpose.msra.mxu0 0.0
  %1255 = vmatprep.subr.mxu0 0.0
  %1256 = vmatpush1.xpose.msra.mxu0 0.0
  %1257 = vmatprep.mubr.f32.mxu0 0.0
  %1258 = vmatmul.mubr.f32.gmra.mrb[0].mxu0 %v1116
  %v1259 = vpop.f32.mrb[0].mxu0
  %v1260 = vadd.f32 0.0, %v1259
  %v1261 = vpop.f32.mrb[0].mxu0
  %v1262 = vadd.f32 0.0, %v1261
  %1263 = vdwg.mxu0
  %v1264 = vadd.f32 %v1086, %v1260
  %v1265 = vadd.f32 %v1087, %v1262
  %v1266 = vld [vmem:[#allocation2 + $0x14] sm:$0xff]
  %v1267 = vld [vmem:[#allocation2 + $0x1c] sm:$0xff]
  %v1268 = vld [vmem:[#allocation2 + $0x24] sm:$0xff]
  %v1269 = vld [vmem:[#allocation2 + $0x2c] sm:$0xff]
  %v1270 = vld [vmem:[#allocation2 + $0x34] sm:$0xff]
  %v1271 = vld [vmem:[#allocation2 + $0x3c] sm:$0xff]
  %v1272 = vld [vmem:[#allocation2 + $0x44] sm:$0xff]
  %v1273 = vld [vmem:[#allocation2 + $0x4c] sm:$0xff]
  %v1274 = vld [vmem:[#allocation2 + $0x54] sm:$0xff]
  %v1275 = vld [vmem:[#allocation2 + $0x5c] sm:$0xff]
  %v1276 = vld [vmem:[#allocation2 + $0x64] sm:$0xff]
  %v1277 = vld [vmem:[#allocation2 + $0x6c] sm:$0xff]
  %v1278 = vld [vmem:[#allocation2 + $0x74] sm:$0xff]
  %v1279 = vld [vmem:[#allocation2 + $0x7c] sm:$0xff]
  %v1280 = vld [vmem:[#allocation2 + $0x84] sm:$0xff]
  %v1281 = vld [vmem:[#allocation2 + $0x8c] sm:$0xff]
  %v1282 = vld [vmem:[#allocation2 + $0x94] sm:$0xff]
  %v1283 = vld [vmem:[#allocation2 + $0x9c] sm:$0xff]
  %v1284 = vld [vmem:[#allocation2 + $0xa4] sm:$0xff]
  %v1285 = vld [vmem:[#allocation2 + $0xac] sm:$0xff]
  %v1286 = vld [vmem:[#allocation2 + $0xb4] sm:$0xff]
  %v1287 = vld [vmem:[#allocation2 + $0xbc] sm:$0xff]
  %v1288 = vld [vmem:[#allocation2 + $0xc4] sm:$0xff]
  %v1289 = vld [vmem:[#allocation2 + $0xcc] sm:$0xff]
  %v1290 = vld [vmem:[#allocation2 + $0xd4] sm:$0xff]
  %s1291 = scalar_lea.vmem %s1, 48
  %v1292 = vld [vmem:[%s1291] sm:$0xff]
  %v1294 = vsel %vm157, %v1292, 0
  %v1297 = vsel %vm157, %v1266, 0
  %v1300 = vsel %vm157, %v1267, 0
  %v1303 = vsel %vm157, %v1268, 0
  %v1306 = vsel %vm157, %v1269, 0
  %v1309 = vsel %vm157, %v1270, 0
  %v1312 = vsel %vm157, %v1271, 0
  %v1315 = vsel %vm157, %v1272, 0
  %v1318 = vsel %vm157, %v1273, 0
  %v1321 = vsel %vm157, %v1274, 0
  %v1324 = vsel %vm157, %v1275, 0
  %v1327 = vsel %vm157, %v1276, 0
  %v1330 = vsel %vm157, %v1277, 0
  %v1333 = vsel %vm157, %v1278, 0
  %v1336 = vsel %vm157, %v1279, 0
  %v1339 = vsel %vm157, %v1280, 0
  %v1342 = vsel %vm157, %v1281, 0
  %v1345 = vsel %vm157, %v1282, 0
  %v1348 = vsel %vm157, %v1283, 0
  %v1351 = vsel %vm157, %v1284, 0
  %v1354 = vsel %vm157, %v1285, 0
  %v1357 = vsel %vm157, %v1286, 0
  %v1360 = vsel %vm157, %v1287, 0
  %v1363 = vsel %vm157, %v1288, 0
  %v1366 = vsel %vm157, %v1289, 0
  %v1369 = vsel %vm157, %v1290, 0
  %1371 = vmatprep.subr.mxu0 0.0
  %1372 = vmatpush1.xpose.msra.mxu0 %v1297
  %1373 = vmatprep.subr.mxu0 0.0
  %1374 = vmatpush1.xpose.msra.mxu0 %v1300
  %1375 = vmatprep.subr.mxu0 0.0
  %1376 = vmatpush1.xpose.msra.mxu0 %v1303
  %1377 = vmatprep.subr.mxu0 0.0
  %1378 = vmatpush1.xpose.msra.mxu0 %v1306
  %1379 = vmatprep.subr.mxu0 0.0
  %1380 = vmatpush1.xpose.msra.mxu0 %v1309
  %1381 = vmatprep.subr.mxu0 0.0
  %1382 = vmatpush1.xpose.msra.mxu0 %v1312
  %1383 = vmatprep.subr.mxu0 0.0
  %1384 = vmatpush1.xpose.msra.mxu0 %v1315
  %1385 = vmatprep.subr.mxu0 0.0
  %1386 = vmatpush1.xpose.msra.mxu0 %v1318
  %1387 = vmatprep.subr.mxu0 0.0
  %1388 = vmatpush1.xpose.msra.mxu0 %v1321
  %1389 = vmatprep.subr.mxu0 0.0
  %1390 = vmatpush1.xpose.msra.mxu0 %v1324
  %1391 = vmatprep.subr.mxu0 0.0
  %1392 = vmatpush1.xpose.msra.mxu0 %v1327
  %1393 = vmatprep.subr.mxu0 0.0
  %1394 = vmatpush1.xpose.msra.mxu0 %v1330
  %1395 = vmatprep.subr.mxu0 0.0
  %1396 = vmatpush1.xpose.msra.mxu0 %v1333
  %1397 = vmatprep.subr.mxu0 0.0
  %1398 = vmatpush1.xpose.msra.mxu0 %v1336
  %1399 = vmatprep.subr.mxu0 0.0
  %1400 = vmatpush1.xpose.msra.mxu0 %v1339
  %1401 = vmatprep.subr.mxu0 0.0
  %1402 = vmatpush1.xpose.msra.mxu0 %v1342
  %1403 = vmatprep.subr.mxu0 0.0
  %1404 = vmatpush1.xpose.msra.mxu0 %v1345
  %1405 = vmatprep.subr.mxu0 0.0
  %1406 = vmatpush1.xpose.msra.mxu0 %v1348
  %1407 = vmatprep.subr.mxu0 0.0
  %1408 = vmatpush1.xpose.msra.mxu0 %v1351
  %1409 = vmatprep.subr.mxu0 0.0
  %1410 = vmatpush1.xpose.msra.mxu0 %v1354
  %1411 = vmatprep.subr.mxu0 0.0
  %1412 = vmatpush1.xpose.msra.mxu0 %v1357
  %1413 = vmatprep.subr.mxu0 0.0
  %1414 = vmatpush1.xpose.msra.mxu0 %v1360
  %1415 = vmatprep.subr.mxu0 0.0
  %1416 = vmatpush1.xpose.msra.mxu0 %v1363
  %1417 = vmatprep.subr.mxu0 0.0
  %1418 = vmatpush1.xpose.msra.mxu0 %v1366
  %1419 = vmatprep.subr.mxu0 0.0
  %1420 = vmatpush1.xpose.msra.mxu0 %v1369
  %1421 = vmatprep.subr.mxu0 0.0
  %1422 = vmatpush1.xpose.msra.mxu0 0.0
  %1423 = vmatprep.subr.mxu0 0.0
  %1424 = vmatpush1.xpose.msra.mxu0 0.0
  %1425 = vmatprep.subr.mxu0 0.0
  %1426 = vmatpush1.xpose.msra.mxu0 0.0
  %1427 = vmatprep.subr.mxu0 0.0
  %1428 = vmatpush1.xpose.msra.mxu0 0.0
  %1429 = vmatprep.subr.mxu0 0.0
  %1430 = vmatpush1.xpose.msra.mxu0 0.0
  %1431 = vmatprep.subr.mxu0 0.0
  %1432 = vmatpush1.xpose.msra.mxu0 0.0
  %1433 = vmatprep.subr.mxu0 0.0
  %1434 = vmatpush1.xpose.msra.mxu0 0.0
  %1435 = vmatprep.mubr.f32.mxu0 0.0
  %1436 = vmatmul.mubr.f32.gmra.mrb[0].mxu0 %v1294
  %v1437 = vpop.f32.mrb[0].mxu0
  %v1438 = vadd.f32 0.0, %v1437
  %v1439 = vpop.f32.mrb[0].mxu0
  %v1440 = vadd.f32 0.0, %v1439
  %1441 = vdwg.mxu0
  %v1442 = vadd.f32 %v1264, %v1438
  %v1443 = vadd.f32 %v1265, %v1440
  %v1444 = vld [vmem:[#allocation2 + $0x15] sm:$0xff]
  %v1445 = vld [vmem:[#allocation2 + $0x1d] sm:$0xff]
  %v1446 = vld [vmem:[#allocation2 + $0x25] sm:$0xff]
  %v1447 = vld [vmem:[#allocation2 + $0x2d] sm:$0xff]
  %v1448 = vld [vmem:[#allocation2 + $0x35] sm:$0xff]
  %v1449 = vld [vmem:[#allocation2 + $0x3d] sm:$0xff]
  %v1450 = vld [vmem:[#allocation2 + $0x45] sm:$0xff]
  %v1451 = vld [vmem:[#allocation2 + $0x4d] sm:$0xff]
  %v1452 = vld [vmem:[#allocation2 + $0x55] sm:$0xff]
  %v1453 = vld [vmem:[#allocation2 + $0x5d] sm:$0xff]
  %v1454 = vld [vmem:[#allocation2 + $0x65] sm:$0xff]
  %v1455 = vld [vmem:[#allocation2 + $0x6d] sm:$0xff]
  %v1456 = vld [vmem:[#allocation2 + $0x75] sm:$0xff]
  %v1457 = vld [vmem:[#allocation2 + $0x7d] sm:$0xff]
  %v1458 = vld [vmem:[#allocation2 + $0x85] sm:$0xff]
  %v1459 = vld [vmem:[#allocation2 + $0x8d] sm:$0xff]
  %v1460 = vld [vmem:[#allocation2 + $0x95] sm:$0xff]
  %v1461 = vld [vmem:[#allocation2 + $0x9d] sm:$0xff]
  %v1462 = vld [vmem:[#allocation2 + $0xa5] sm:$0xff]
  %v1463 = vld [vmem:[#allocation2 + $0xad] sm:$0xff]
  %v1464 = vld [vmem:[#allocation2 + $0xb5] sm:$0xff]
  %v1465 = vld [vmem:[#allocation2 + $0xbd] sm:$0xff]
  %v1466 = vld [vmem:[#allocation2 + $0xc5] sm:$0xff]
  %v1467 = vld [vmem:[#allocation2 + $0xcd] sm:$0xff]
  %v1468 = vld [vmem:[#allocation2 + $0xd5] sm:$0xff]
  %s1469 = scalar_lea.vmem %s1, 56
  %v1470 = vld [vmem:[%s1469] sm:$0xff]
  %v1472 = vsel %vm157, %v1470, 0
  %v1475 = vsel %vm157, %v1444, 0
  %v1478 = vsel %vm157, %v1445, 0
  %v1481 = vsel %vm157, %v1446, 0
  %v1484 = vsel %vm157, %v1447, 0
  %v1487 = vsel %vm157, %v1448, 0
  %v1490 = vsel %vm157, %v1449, 0
  %v1493 = vsel %vm157, %v1450, 0
  %v1496 = vsel %vm157, %v1451, 0
  %v1499 = vsel %vm157, %v1452, 0
  %v1502 = vsel %vm157, %v1453, 0
  %v1505 = vsel %vm157, %v1454, 0
  %v1508 = vsel %vm157, %v1455, 0
  %v1511 = vsel %vm157, %v1456, 0
  %v1514 = vsel %vm157, %v1457, 0
  %v1517 = vsel %vm157, %v1458, 0
  %v1520 = vsel %vm157, %v1459, 0
  %v1523 = vsel %vm157, %v1460, 0
  %v1526 = vsel %vm157, %v1461, 0
  %v1529 = vsel %vm157, %v1462, 0
  %v1532 = vsel %vm157, %v1463, 0
  %v1535 = vsel %vm157, %v1464, 0
  %v1538 = vsel %vm157, %v1465, 0
  %v1541 = vsel %vm157, %v1466, 0
  %v1544 = vsel %vm157, %v1467, 0
  %v1547 = vsel %vm157, %v1468, 0
  %1549 = vmatprep.subr.mxu0 0.0
  %1550 = vmatpush1.xpose.msra.mxu0 %v1475
  %1551 = vmatprep.subr.mxu0 0.0
  %1552 = vmatpush1.xpose.msra.mxu0 %v1478
  %1553 = vmatprep.subr.mxu0 0.0
  %1554 = vmatpush1.xpose.msra.mxu0 %v1481
  %1555 = vmatprep.subr.mxu0 0.0
  %1556 = vmatpush1.xpose.msra.mxu0 %v1484
  %1557 = vmatprep.subr.mxu0 0.0
  %1558 = vmatpush1.xpose.msra.mxu0 %v1487
  %1559 = vmatprep.subr.mxu0 0.0
  %1560 = vmatpush1.xpose.msra.mxu0 %v1490
  %1561 = vmatprep.subr.mxu0 0.0
  %1562 = vmatpush1.xpose.msra.mxu0 %v1493
  %1563 = vmatprep.subr.mxu0 0.0
  %1564 = vmatpush1.xpose.msra.mxu0 %v1496
  %1565 = vmatprep.subr.mxu0 0.0
  %1566 = vmatpush1.xpose.msra.mxu0 %v1499
  %1567 = vmatprep.subr.mxu0 0.0
  %1568 = vmatpush1.xpose.msra.mxu0 %v1502
  %1569 = vmatprep.subr.mxu0 0.0
  %1570 = vmatpush1.xpose.msra.mxu0 %v1505
  %1571 = vmatprep.subr.mxu0 0.0
  %1572 = vmatpush1.xpose.msra.mxu0 %v1508
  %1573 = vmatprep.subr.mxu0 0.0
  %1574 = vmatpush1.xpose.msra.mxu0 %v1511
  %1575 = vmatprep.subr.mxu0 0.0
  %1576 = vmatpush1.xpose.msra.mxu0 %v1514
  %1577 = vmatprep.subr.mxu0 0.0
  %1578 = vmatpush1.xpose.msra.mxu0 %v1517
  %1579 = vmatprep.subr.mxu0 0.0
  %1580 = vmatpush1.xpose.msra.mxu0 %v1520
  %1581 = vmatprep.subr.mxu0 0.0
  %1582 = vmatpush1.xpose.msra.mxu0 %v1523
  %1583 = vmatprep.subr.mxu0 0.0
  %1584 = vmatpush1.xpose.msra.mxu0 %v1526
  %1585 = vmatprep.subr.mxu0 0.0
  %1586 = vmatpush1.xpose.msra.mxu0 %v1529
  %1587 = vmatprep.subr.mxu0 0.0
  %1588 = vmatpush1.xpose.msra.mxu0 %v1532
  %1589 = vmatprep.subr.mxu0 0.0
  %1590 = vmatpush1.xpose.msra.mxu0 %v1535
  %1591 = vmatprep.subr.mxu0 0.0
  %1592 = vmatpush1.xpose.msra.mxu0 %v1538
  %1593 = vmatprep.subr.mxu0 0.0
  %1594 = vmatpush1.xpose.msra.mxu0 %v1541
  %1595 = vmatprep.subr.mxu0 0.0
  %1596 = vmatpush1.xpose.msra.mxu0 %v1544
  %1597 = vmatprep.subr.mxu0 0.0
  %1598 = vmatpush1.xpose.msra.mxu0 %v1547
  %1599 = vmatprep.subr.mxu0 0.0
  %1600 = vmatpush1.xpose.msra.mxu0 0.0
  %1601 = vmatprep.subr.mxu0 0.0
  %1602 = vmatpush1.xpose.msra.mxu0 0.0
  %1603 = vmatprep.subr.mxu0 0.0
  %1604 = vmatpush1.xpose.msra.mxu0 0.0
  %1605 = vmatprep.subr.mxu0 0.0
  %1606 = vmatpush1.xpose.msra.mxu0 0.0
  %1607 = vmatprep.subr.mxu0 0.0
  %1608 = vmatpush1.xpose.msra.mxu0 0.0
  %1609 = vmatprep.subr.mxu0 0.0
  %1610 = vmatpush1.xpose.msra.mxu0 0.0
  %1611 = vmatprep.subr.mxu0 0.0
  %1612 = vmatpush1.xpose.msra.mxu0 0.0
  %1613 = vmatprep.mubr.f32.mxu0 0.0
  %1614 = vmatmul.mubr.f32.gmra.mrb[0].mxu0 %v1472
  %v1615 = vpop.f32.mrb[0].mxu0
  %v1616 = vadd.f32 0.0, %v1615
  %v1617 = vpop.f32.mrb[0].mxu0
  %v1618 = vadd.f32 0.0, %v1617
  %1619 = vdwg.mxu0
  %v1620 = vadd.f32 %v1442, %v1616
  %v1621 = vadd.f32 %v1443, %v1618
  %v1622 = vld [vmem:[#allocation2 + $0x16] sm:$0xff]
  %v1623 = vld [vmem:[#allocation2 + $0x1e] sm:$0xff]
  %v1624 = vld [vmem:[#allocation2 + $0x26] sm:$0xff]
  %v1625 = vld [vmem:[#allocation2 + $0x2e] sm:$0xff]
  %v1626 = vld [vmem:[#allocation2 + $0x36] sm:$0xff]
  %v1627 = vld [vmem:[#allocation2 + $0x3e] sm:$0xff]
  %v1628 = vld [vmem:[#allocation2 + $0x46] sm:$0xff]
  %v1629 = vld [vmem:[#allocation2 + $0x4e] sm:$0xff]
  %v1630 = vld [vmem:[#allocation2 + $0x56] sm:$0xff]
  %v1631 = vld [vmem:[#allocation2 + $0x5e] sm:$0xff]
  %v1632 = vld [vmem:[#allocation2 + $0x66] sm:$0xff]
  %v1633 = vld [vmem:[#allocation2 + $0x6e] sm:$0xff]
  %v1634 = vld [vmem:[#allocation2 + $0x76] sm:$0xff]
  %v1635 = vld [vmem:[#allocation2 + $0x7e] sm:$0xff]
  %v1636 = vld [vmem:[#allocation2 + $0x86] sm:$0xff]
  %v1637 = vld [vmem:[#allocation2 + $0x8e] sm:$0xff]
  %v1638 = vld [vmem:[#allocation2 + $0x96] sm:$0xff]
  %v1639 = vld [vmem:[#allocation2 + $0x9e] sm:$0xff]
  %v1640 = vld [vmem:[#allocation2 + $0xa6] sm:$0xff]
  %v1641 = vld [vmem:[#allocation2 + $0xae] sm:$0xff]
  %v1642 = vld [vmem:[#allocation2 + $0xb6] sm:$0xff]
  %v1643 = vld [vmem:[#allocation2 + $0xbe] sm:$0xff]
  %v1644 = vld [vmem:[#allocation2 + $0xc6] sm:$0xff]
  %v1645 = vld [vmem:[#allocation2 + $0xce] sm:$0xff]
  %v1646 = vld [vmem:[#allocation2 + $0xd6] sm:$0xff]
  %s1647 = scalar_lea.vmem %s1, 64
  %v1648 = vld [vmem:[%s1647] sm:$0xff]
  %v1650 = vsel %vm157, %v1648, 0
  %v1653 = vsel %vm157, %v1622, 0
  %v1656 = vsel %vm157, %v1623, 0
  %v1659 = vsel %vm157, %v1624, 0
  %v1662 = vsel %vm157, %v1625, 0
  %v1665 = vsel %vm157, %v1626, 0
  %v1668 = vsel %vm157, %v1627, 0
  %v1671 = vsel %vm157, %v1628, 0
  %v1674 = vsel %vm157, %v1629, 0
  %v1677 = vsel %vm157, %v1630, 0
  %v1680 = vsel %vm157, %v1631, 0
  %v1683 = vsel %vm157, %v1632, 0
  %v1686 = vsel %vm157, %v1633, 0
  %v1689 = vsel %vm157, %v1634, 0
  %v1692 = vsel %vm157, %v1635, 0
  %v1695 = vsel %vm157, %v1636, 0
  %v1698 = vsel %vm157, %v1637, 0
  %v1701 = vsel %vm157, %v1638, 0
  %v1704 = vsel %vm157, %v1639, 0
  %v1707 = vsel %vm157, %v1640, 0
  %v1710 = vsel %vm157, %v1641, 0
  %v1713 = vsel %vm157, %v1642, 0
  %v1716 = vsel %vm157, %v1643, 0
  %v1719 = vsel %vm157, %v1644, 0
  %v1722 = vsel %vm157, %v1645, 0
  %v1725 = vsel %vm157, %v1646, 0
  %1727 = vmatprep.subr.mxu0 0.0
  %1728 = vmatpush1.xpose.msra.mxu0 %v1653
  %1729 = vmatprep.subr.mxu0 0.0
  %1730 = vmatpush1.xpose.msra.mxu0 %v1656
  %1731 = vmatprep.subr.mxu0 0.0
  %1732 = vmatpush1.xpose.msra.mxu0 %v1659
  %1733 = vmatprep.subr.mxu0 0.0
  %1734 = vmatpush1.xpose.msra.mxu0 %v1662
  %1735 = vmatprep.subr.mxu0 0.0
  %1736 = vmatpush1.xpose.msra.mxu0 %v1665
  %1737 = vmatprep.subr.mxu0 0.0
  %1738 = vmatpush1.xpose.msra.mxu0 %v1668
  %1739 = vmatprep.subr.mxu0 0.0
  %1740 = vmatpush1.xpose.msra.mxu0 %v1671
  %1741 = vmatprep.subr.mxu0 0.0
  %1742 = vmatpush1.xpose.msra.mxu0 %v1674
  %1743 = vmatprep.subr.mxu0 0.0
  %1744 = vmatpush1.xpose.msra.mxu0 %v1677
  %1745 = vmatprep.subr.mxu0 0.0
  %1746 = vmatpush1.xpose.msra.mxu0 %v1680
  %1747 = vmatprep.subr.mxu0 0.0
  %1748 = vmatpush1.xpose.msra.mxu0 %v1683
  %1749 = vmatprep.subr.mxu0 0.0
  %1750 = vmatpush1.xpose.msra.mxu0 %v1686
  %1751 = vmatprep.subr.mxu0 0.0
  %1752 = vmatpush1.xpose.msra.mxu0 %v1689
  %1753 = vmatprep.subr.mxu0 0.0
  %1754 = vmatpush1.xpose.msra.mxu0 %v1692
  %1755 = vmatprep.subr.mxu0 0.0
  %1756 = vmatpush1.xpose.msra.mxu0 %v1695
  %1757 = vmatprep.subr.mxu0 0.0
  %1758 = vmatpush1.xpose.msra.mxu0 %v1698
  %1759 = vmatprep.subr.mxu0 0.0
  %1760 = vmatpush1.xpose.msra.mxu0 %v1701
  %1761 = vmatprep.subr.mxu0 0.0
  %1762 = vmatpush1.xpose.msra.mxu0 %v1704
  %1763 = vmatprep.subr.mxu0 0.0
  %1764 = vmatpush1.xpose.msra.mxu0 %v1707
  %1765 = vmatprep.subr.mxu0 0.0
  %1766 = vmatpush1.xpose.msra.mxu0 %v1710
  %1767 = vmatprep.subr.mxu0 0.0
  %1768 = vmatpush1.xpose.msra.mxu0 %v1713
  %1769 = vmatprep.subr.mxu0 0.0
  %1770 = vmatpush1.xpose.msra.mxu0 %v1716
  %1771 = vmatprep.subr.mxu0 0.0
  %1772 = vmatpush1.xpose.msra.mxu0 %v1719
  %1773 = vmatprep.subr.mxu0 0.0
  %1774 = vmatpush1.xpose.msra.mxu0 %v1722
  %1775 = vmatprep.subr.mxu0 0.0
  %1776 = vmatpush1.xpose.msra.mxu0 %v1725
  %1777 = vmatprep.subr.mxu0 0.0
  %1778 = vmatpush1.xpose.msra.mxu0 0.0
  %1779 = vmatprep.subr.mxu0 0.0
  %1780 = vmatpush1.xpose.msra.mxu0 0.0
  %1781 = vmatprep.subr.mxu0 0.0
  %1782 = vmatpush1.xpose.msra.mxu0 0.0
  %1783 = vmatprep.subr.mxu0 0.0
  %1784 = vmatpush1.xpose.msra.mxu0 0.0
  %1785 = vmatprep.subr.mxu0 0.0
  %1786 = vmatpush1.xpose.msra.mxu0 0.0
  %1787 = vmatprep.subr.mxu0 0.0
  %1788 = vmatpush1.xpose.msra.mxu0 0.0
  %1789 = vmatprep.subr.mxu0 0.0
  %1790 = vmatpush1.xpose.msra.mxu0 0.0
  %1791 = vmatprep.mubr.f32.mxu0 0.0
  %1792 = vmatmul.mubr.f32.gmra.mrb[0].mxu0 %v1650
  %v1793 = vpop.f32.mrb[0].mxu0
  %v1794 = vadd.f32 0.0, %v1793
  %v1795 = vpop.f32.mrb[0].mxu0
  %v1796 = vadd.f32 0.0, %v1795
  %1797 = vdwg.mxu0
  %v1798 = vadd.f32 %v1620, %v1794
  %v1799 = vadd.f32 %v1621, %v1796
  %v1800 = vld [vmem:[%s2] sm:$0xff]
  %1802 = vset.pattern.permute.xlu0 0
  %1803 = vperm.xlu0 %1802, %v1800
  %v1804 = vpop.permute.xlu0 %1803
  %v1806 = vmul.f32 %v1798, %v1804
  %v1807 = vmul.f32 %v1799, %v1804
  %v1808 = vld [vmem:[%s3] sm:$0xff]
  %1810 = vset.pattern.permute.xlu0 0
  %1811 = vperm.xlu0 %1810, %v1808
  %v1812 = vpop.permute.xlu0 %1811
  %v1814 = vadd.f32 %v1806, %v1812
  %v1815 = vadd.f32 %v1807, %v1812
  %v1816 = vmax.f32 %v1814, 0.0
  %v1817 = vmax.f32 %v1815, 0.0
  %v1818 = vld [vmem:[%s7] sm:$0x3]
  %v1820 = vlaneseq
  %v1821 = vshrl.u32 %v1820, 7
  %v1822 = vsub.s32 0, %v1821
  %v1823 = vrot.slane %v1818, %v1822
  %v1824 = vlaneseq
  %v1825 = vshrl.u32 %v1824, 7
  %v1826 = vsub.s32 1, %v1825
  %v1827 = vrot.slane %v1818, %v1826
  %v1830 = vmul.f32 %v1816, %v1823
  %v1831 = vmul.f32 %v1817, %v1827
  %1832 = vst [vmem:[#allocation3] sm:$0xff] 0.0
  %vm1833 = vcmask 769024
  %1834 = vst.msk [vmem:[#allocation3 + $0x8] sm:$0xff] %vm1833, 0.0
  %1837 = vrot.lane.b32.xlu0 %v1830, 11
  %v1838 = vpop.permute.xlu0 %1837
  %1839 = vrot.lane.b32.xlu0 %v1831, 11
  %v1840 = vpop.permute.xlu0 %1839
  %vm1841 = vcmask 89088
  %v1842 = vsel %vm1841, %v1838, %v1840
  %vm1845 = vcmask 1047640
  %1846 = vst.msk [vmem:[#allocation3] sm:$0xff] %vm1845, %v1838
  %vm1847 = vcmask 678912
  %1848 = vst.msk [vmem:[#allocation3 + $0x8] sm:$0xff] %vm1847, %v1842
  %v1849 = vld [vmem:[#allocation3] sm:$0xff]
  %v1850 = vld [vmem:[#allocation3 + $0x8] sm:$0xff]
  %v1851 = vld [vmem:[%s4] sm:$0xff]
  %s1852 = scalar_lea.vmem %s4, 8
  %v1853 = vld [vmem:[%s1852] sm:$0xff]
  %1856 = vrot.lane.b32.xlu0 %v1849, 127
  %v1857 = vpop.permute.xlu0 %1856
  %1858 = vrot.lane.b32.xlu0 %v1850, 127
  %v1859 = vpop.permute.xlu0 %1858
  %vm1860 = vcmask 1039360
  %v1861 = vsel %vm1860, %v1857, %v1859
  %vm1864 = vcmask 64512
  %v1866 = vsel %vm1864, %v1853, 0
  %1868 = vmatprep.subr.mxu0 %v1859
  %1869 = vmatpush1.msra.mxu0 %v1861
  %1870 = vmatprep.subr.mxu0 0.0
  %1871 = vmatpush1.msra.mxu0 0.0
  %1872 = vmatprep.subr.mxu0 0.0
  %1873 = vmatpush1.msra.mxu0 0.0
  %1874 = vmatprep.subr.mxu0 0.0
  %1875 = vmatpush1.msra.mxu0 0.0
  %1876 = vmatprep.subr.mxu0 0.0
  %1877 = vmatpush1.msra.mxu0 0.0
  %1878 = vmatprep.subr.mxu0 0.0
  %1879 = vmatpush1.msra.mxu0 0.0
  %1880 = vmatprep.subr.mxu0 0.0
  %1881 = vmatpush1.msra.mxu0 0.0
  %1882 = vmatprep.subr.mxu0 0.0
  %1883 = vmatpush1.msra.mxu0 0.0
  %1884 = vmatprep.subr.mxu0 0.0
  %1885 = vmatpush1.msra.mxu0 0.0
  %1886 = vmatprep.subr.mxu0 0.0
  %1887 = vmatpush1.msra.mxu0 0.0
  %1888 = vmatprep.subr.mxu0 0.0
  %1889 = vmatpush1.msra.mxu0 0.0
  %1890 = vmatprep.subr.mxu0 0.0
  %1891 = vmatpush1.msra.mxu0 0.0
  %1892 = vmatprep.subr.mxu0 0.0
  %1893 = vmatpush1.msra.mxu0 0.0
  %1894 = vmatprep.subr.mxu0 0.0
  %1895 = vmatpush1.msra.mxu0 0.0
  %1896 = vmatprep.subr.mxu0 0.0
  %1897 = vmatpush1.msra.mxu0 0.0
  %1898 = vmatprep.subr.mxu0 0.0
  %1899 = vmatpush1.msra.mxu0 0.0
  %1900 = vmatprep.subr.mxu0 0.0
  %1901 = vmatpush1.msra.mxu0 0.0
  %1902 = vmatprep.subr.mxu0 0.0
  %1903 = vmatpush1.msra.mxu0 0.0
  %1904 = vmatprep.subr.mxu0 0.0
  %1905 = vmatpush1.msra.mxu0 0.0
  %1906 = vmatprep.subr.mxu0 0.0
  %1907 = vmatpush1.msra.mxu0 0.0
  %1908 = vmatprep.subr.mxu0 0.0
  %1909 = vmatpush1.msra.mxu0 0.0
  %1910 = vmatprep.subr.mxu0 0.0
  %1911 = vmatpush1.msra.mxu0 0.0
  %1912 = vmatprep.subr.mxu0 0.0
  %1913 = vmatpush1.msra.mxu0 0.0
  %1914 = vmatprep.subr.mxu0 0.0
  %1915 = vmatpush1.msra.mxu0 0.0
  %1916 = vmatprep.subr.mxu0 0.0
  %1917 = vmatpush1.msra.mxu0 0.0
  %1918 = vmatprep.subr.mxu0 0.0
  %1919 = vmatpush1.msra.mxu0 0.0
  %1920 = vmatprep.subr.mxu0 0.0
  %1921 = vmatpush1.msra.mxu0 0.0
  %1922 = vmatprep.subr.mxu0 0.0
  %1923 = vmatpush1.msra.mxu0 0.0
  %1924 = vmatprep.subr.mxu0 0.0
  %1925 = vmatpush1.msra.mxu0 0.0
  %1926 = vmatprep.subr.mxu0 0.0
  %1927 = vmatpush1.msra.mxu0 0.0
  %1928 = vmatprep.subr.mxu0 0.0
  %1929 = vmatpush1.msra.mxu0 0.0
  %1930 = vmatprep.subr.mxu0 0.0
  %1931 = vmatpush1.msra.mxu0 0.0
  %1932 = vmatprep.mubr.f32.mxu0 0.0
  %1933 = vmatmul.mubr.f32.gmra.mrb[0].mxu0 %v1866
  %v1934 = vpop.f32.mrb[0].mxu0
  %v1935 = vadd.f32 0.0, %v1934
  %v1936 = vpop.f32.mrb[0].mxu0
  %v1937 = vadd.f32 0.0, %v1936
  %1938 = vdwg.mxu0
  %v1940 = vsel %vm1864, %v1851, 0
  %1942 = vmatprep.subr.mxu0 %v1850
  %1943 = vmatpush1.msra.mxu0 %v1849
  %1944 = vmatprep.subr.mxu0 0.0
  %1945 = vmatpush1.msra.mxu0 0.0
  %1946 = vmatprep.subr.mxu0 0.0
  %1947 = vmatpush1.msra.mxu0 0.0
  %1948 = vmatprep.subr.mxu0 0.0
  %1949 = vmatpush1.msra.mxu0 0.0
  %1950 = vmatprep.subr.mxu0 0.0
  %1951 = vmatpush1.msra.mxu0 0.0
  %1952 = vmatprep.subr.mxu0 0.0
  %1953 = vmatpush1.msra.mxu0 0.0
  %1954 = vmatprep.subr.mxu0 0.0
  %1955 = vmatpush1.msra.mxu0 0.0
  %1956 = vmatprep.subr.mxu0 0.0
  %1957 = vmatpush1.msra.mxu0 0.0
  %1958 = vmatprep.subr.mxu0 0.0
  %1959 = vmatpush1.msra.mxu0 0.0
  %1960 = vmatprep.subr.mxu0 0.0
  %1961 = vmatpush1.msra.mxu0 0.0
  %1962 = vmatprep.subr.mxu0 0.0
  %1963 = vmatpush1.msra.mxu0 0.0
  %1964 = vmatprep.subr.mxu0 0.0
  %1965 = vmatpush1.msra.mxu0 0.0
  %1966 = vmatprep.subr.mxu0 0.0
  %1967 = vmatpush1.msra.mxu0 0.0
  %1968 = vmatprep.subr.mxu0 0.0
  %1969 = vmatpush1.msra.mxu0 0.0
  %1970 = vmatprep.subr.mxu0 0.0
  %1971 = vmatpush1.msra.mxu0 0.0
  %1972 = vmatprep.subr.mxu0 0.0
  %1973 = vmatpush1.msra.mxu0 0.0
  %1974 = vmatprep.subr.mxu0 0.0
  %1975 = vmatpush1.msra.mxu0 0.0
  %1976 = vmatprep.subr.mxu0 0.0
  %1977 = vmatpush1.msra.mxu0 0.0
  %1978 = vmatprep.subr.mxu0 0.0
  %1979 = vmatpush1.msra.mxu0 0.0
  %1980 = vmatprep.subr.mxu0 0.0
  %1981 = vmatpush1.msra.mxu0 0.0
  %1982 = vmatprep.subr.mxu0 0.0
  %1983 = vmatpush1.msra.mxu0 0.0
  %1984 = vmatprep.subr.mxu0 0.0
  %1985 = vmatpush1.msra.mxu0 0.0
  %1986 = vmatprep.subr.mxu0 0.0
  %1987 = vmatpush1.msra.mxu0 0.0
  %1988 = vmatprep.subr.mxu0 0.0
  %1989 = vmatpush1.msra.mxu0 0.0
  %1990 = vmatprep.subr.mxu0 0.0
  %1991 = vmatpush1.msra.mxu0 0.0
  %1992 = vmatprep.subr.mxu0 0.0
  %1993 = vmatpush1.msra.mxu0 0.0
  %1994 = vmatprep.subr.mxu0 0.0
  %1995 = vmatpush1.msra.mxu0 0.0
  %1996 = vmatprep.subr.mxu0 0.0
  %1997 = vmatpush1.msra.mxu0 0.0
  %1998 = vmatprep.subr.mxu0 0.0
  %1999 = vmatpush1.msra.mxu0 0.0
  %2000 = vmatprep.subr.mxu0 0.0
  %2001 = vmatpush1.msra.mxu0 0.0
  %2002 = vmatprep.subr.mxu0 0.0
  %2003 = vmatpush1.msra.mxu0 0.0
  %2004 = vmatprep.subr.mxu0 0.0
  %2005 = vmatpush1.msra.mxu0 0.0
  %2006 = vmatprep.mubr.f32.mxu0 0.0
  %2007 = vmatmul.mubr.f32.gmra.mrb[0].mxu0 %v1940
  %v2008 = vpop.f32.mrb[0].mxu0
  %v2009 = vadd.f32 %v1935, %v2008
  %v2010 = vpop.f32.mrb[0].mxu0
  %v2011 = vadd.f32 %v1937, %v2010
  %2012 = vdwg.mxu0
  %s2013 = scalar_lea.vmem %s4, 16
  %v2014 = vld [vmem:[%s2013] sm:$0xff]
  %2015 = vrot.lane.b32.xlu0 %v1849, 126
  %v2016 = vpop.permute.xlu0 %2015
  %2017 = vrot.lane.b32.xlu0 %v1850, 126
  %v2018 = vpop.permute.xlu0 %2017
  %vm2019 = vcmask 1031168
  %v2020 = vsel %vm2019, %v2016, %v2018
  %v2024 = vsel %vm1864, %v2014, 0
  %2026 = vmatprep.subr.mxu0 %v2018
  %2027 = vmatpush1.msra.mxu0 %v2020
  %2028 = vmatprep.subr.mxu0 0.0
  %2029 = vmatpush1.msra.mxu0 0.0
  %2030 = vmatprep.subr.mxu0 0.0
  %2031 = vmatpush1.msra.mxu0 0.0
  %2032 = vmatprep.subr.mxu0 0.0
  %2033 = vmatpush1.msra.mxu0 0.0
  %2034 = vmatprep.subr.mxu0 0.0
  %2035 = vmatpush1.msra.mxu0 0.0
  %2036 = vmatprep.subr.mxu0 0.0
  %2037 = vmatpush1.msra.mxu0 0.0
  %2038 = vmatprep.subr.mxu0 0.0
  %2039 = vmatpush1.msra.mxu0 0.0
  %2040 = vmatprep.subr.mxu0 0.0
  %2041 = vmatpush1.msra.mxu0 0.0
  %2042 = vmatprep.subr.mxu0 0.0
  %2043 = vmatpush1.msra.mxu0 0.0
  %2044 = vmatprep.subr.mxu0 0.0
  %2045 = vmatpush1.msra.mxu0 0.0
  %2046 = vmatprep.subr.mxu0 0.0
  %2047 = vmatpush1.msra.mxu0 0.0
  %2048 = vmatprep.subr.mxu0 0.0
  %2049 = vmatpush1.msra.mxu0 0.0
  %2050 = vmatprep.subr.mxu0 0.0
  %2051 = vmatpush1.msra.mxu0 0.0
  %2052 = vmatprep.subr.mxu0 0.0
  %2053 = vmatpush1.msra.mxu0 0.0
  %2054 = vmatprep.subr.mxu0 0.0
  %2055 = vmatpush1.msra.mxu0 0.0
  %2056 = vmatprep.subr.mxu0 0.0
  %2057 = vmatpush1.msra.mxu0 0.0
  %2058 = vmatprep.subr.mxu0 0.0
  %2059 = vmatpush1.msra.mxu0 0.0
  %2060 = vmatprep.subr.mxu0 0.0
  %2061 = vmatpush1.msra.mxu0 0.0
  %2062 = vmatprep.subr.mxu0 0.0
  %2063 = vmatpush1.msra.mxu0 0.0
  %2064 = vmatprep.subr.mxu0 0.0
  %2065 = vmatpush1.msra.mxu0 0.0
  %2066 = vmatprep.subr.mxu0 0.0
  %2067 = vmatpush1.msra.mxu0 0.0
  %2068 = vmatprep.subr.mxu0 0.0
  %2069 = vmatpush1.msra.mxu0 0.0
  %2070 = vmatprep.subr.mxu0 0.0
  %2071 = vmatpush1.msra.mxu0 0.0
  %2072 = vmatprep.subr.mxu0 0.0
  %2073 = vmatpush1.msra.mxu0 0.0
  %2074 = vmatprep.subr.mxu0 0.0
  %2075 = vmatpush1.msra.mxu0 0.0
  %2076 = vmatprep.subr.mxu0 0.0
  %2077 = vmatpush1.msra.mxu0 0.0
  %2078 = vmatprep.subr.mxu0 0.0
  %2079 = vmatpush1.msra.mxu0 0.0
  %2080 = vmatprep.subr.mxu0 0.0
  %2081 = vmatpush1.msra.mxu0 0.0
  %2082 = vmatprep.subr.mxu0 0.0
  %2083 = vmatpush1.msra.mxu0 0.0
  %2084 = vmatprep.subr.mxu0 0.0
  %2085 = vmatpush1.msra.mxu0 0.0
  %2086 = vmatprep.subr.mxu0 0.0
  %2087 = vmatpush1.msra.mxu0 0.0
  %2088 = vmatprep.subr.mxu0 0.0
  %2089 = vmatpush1.msra.mxu0 0.0
  %2090 = vmatprep.mubr.f32.mxu0 0.0
  %2091 = vmatmul.mubr.f32.gmra.mrb[0].mxu0 %v2024
  %v2092 = vpop.f32.mrb[0].mxu0
  %v2093 = vadd.f32 0.0, %v2092
  %v2094 = vpop.f32.mrb[0].mxu0
  %v2095 = vadd.f32 0.0, %v2094
  %2096 = vdwg.mxu0
  %v2097 = vadd.f32 %v2009, %v2093
  %v2098 = vadd.f32 %v2011, %v2095
  %s2099 = scalar_lea.vmem %s4, 24
  %v2100 = vld [vmem:[%s2099] sm:$0xff]
  %2101 = vrot.lane.b32.xlu0 %v1849, 118
  %v2102 = vpop.permute.xlu0 %2101
  %2103 = vrot.lane.b32.xlu0 %v1850, 118
  %v2104 = vpop.permute.xlu0 %2103
  %vm2105 = vcmask 965632
  %v2106 = vsel %vm2105, %v2102, %v2104
  %v2110 = vsel %vm1864, %v2100, 0
  %2112 = vmatprep.subr.mxu0 %v2104
  %2113 = vmatpush1.msra.mxu0 %v2106
  %2114 = vmatprep.subr.mxu0 0.0
  %2115 = vmatpush1.msra.mxu0 0.0
  %2116 = vmatprep.subr.mxu0 0.0
  %2117 = vmatpush1.msra.mxu0 0.0
  %2118 = vmatprep.subr.mxu0 0.0
  %2119 = vmatpush1.msra.mxu0 0.0
  %2120 = vmatprep.subr.mxu0 0.0
  %2121 = vmatpush1.msra.mxu0 0.0
  %2122 = vmatprep.subr.mxu0 0.0
  %2123 = vmatpush1.msra.mxu0 0.0
  %2124 = vmatprep.subr.mxu0 0.0
  %2125 = vmatpush1.msra.mxu0 0.0
  %2126 = vmatprep.subr.mxu0 0.0
  %2127 = vmatpush1.msra.mxu0 0.0
  %2128 = vmatprep.subr.mxu0 0.0
  %2129 = vmatpush1.msra.mxu0 0.0
  %2130 = vmatprep.subr.mxu0 0.0
  %2131 = vmatpush1.msra.mxu0 0.0
  %2132 = vmatprep.subr.mxu0 0.0
  %2133 = vmatpush1.msra.mxu0 0.0
  %2134 = vmatprep.subr.mxu0 0.0
  %2135 = vmatpush1.msra.mxu0 0.0
  %2136 = vmatprep.subr.mxu0 0.0
  %2137 = vmatpush1.msra.mxu0 0.0
  %2138 = vmatprep.subr.mxu0 0.0
  %2139 = vmatpush1.msra.mxu0 0.0
  %2140 = vmatprep.subr.mxu0 0.0
  %2141 = vmatpush1.msra.mxu0 0.0
  %2142 = vmatprep.subr.mxu0 0.0
  %2143 = vmatpush1.msra.mxu0 0.0
  %2144 = vmatprep.subr.mxu0 0.0
  %2145 = vmatpush1.msra.mxu0 0.0
  %2146 = vmatprep.subr.mxu0 0.0
  %2147 = vmatpush1.msra.mxu0 0.0
  %2148 = vmatprep.subr.mxu0 0.0
  %2149 = vmatpush1.msra.mxu0 0.0
  %2150 = vmatprep.subr.mxu0 0.0
  %2151 = vmatpush1.msra.mxu0 0.0
  %2152 = vmatprep.subr.mxu0 0.0
  %2153 = vmatpush1.msra.mxu0 0.0
  %2154 = vmatprep.subr.mxu0 0.0
  %2155 = vmatpush1.msra.mxu0 0.0
  %2156 = vmatprep.subr.mxu0 0.0
  %2157 = vmatpush1.msra.mxu0 0.0
  %2158 = vmatprep.subr.mxu0 0.0
  %2159 = vmatpush1.msra.mxu0 0.0
  %2160 = vmatprep.subr.mxu0 0.0
  %2161 = vmatpush1.msra.mxu0 0.0
  %2162 = vmatprep.subr.mxu0 0.0
  %2163 = vmatpush1.msra.mxu0 0.0
  %2164 = vmatprep.subr.mxu0 0.0
  %2165 = vmatpush1.msra.mxu0 0.0
  %2166 = vmatprep.subr.mxu0 0.0
  %2167 = vmatpush1.msra.mxu0 0.0
  %2168 = vmatprep.subr.mxu0 0.0
  %2169 = vmatpush1.msra.mxu0 0.0
  %2170 = vmatprep.subr.mxu0 0.0
  %2171 = vmatpush1.msra.mxu0 0.0
  %2172 = vmatprep.subr.mxu0 0.0
  %2173 = vmatpush1.msra.mxu0 0.0
  %2174 = vmatprep.subr.mxu0 0.0
  %2175 = vmatpush1.msra.mxu0 0.0
  %2176 = vmatprep.mubr.f32.mxu0 0.0
  %2177 = vmatmul.mubr.f32.gmra.mrb[0].mxu0 %v2110
  %v2178 = vpop.f32.mrb[0].mxu0
  %v2179 = vadd.f32 0.0, %v2178
  %v2180 = vpop.f32.mrb[0].mxu0
  %v2181 = vadd.f32 0.0, %v2180
  %2182 = vdwg.mxu0
  %v2183 = vadd.f32 %v2097, %v2179
  %v2184 = vadd.f32 %v2098, %v2181
  %s2185 = scalar_lea.vmem %s4, 32
  %v2186 = vld [vmem:[%s2185] sm:$0xff]
  %2187 = vrot.lane.b32.xlu0 %v1849, 117
  %v2188 = vpop.permute.xlu0 %2187
  %2189 = vrot.lane.b32.xlu0 %v1850, 117
  %v2190 = vpop.permute.xlu0 %2189
  %vm2191 = vcmask 957440
  %v2192 = vsel %vm2191, %v2188, %v2190
  %v2196 = vsel %vm1864, %v2186, 0
  %2198 = vmatprep.subr.mxu0 %v2190
  %2199 = vmatpush1.msra.mxu0 %v2192
  %2200 = vmatprep.subr.mxu0 0.0
  %2201 = vmatpush1.msra.mxu0 0.0
  %2202 = vmatprep.subr.mxu0 0.0
  %2203 = vmatpush1.msra.mxu0 0.0
  %2204 = vmatprep.subr.mxu0 0.0
  %2205 = vmatpush1.msra.mxu0 0.0
  %2206 = vmatprep.subr.mxu0 0.0
  %2207 = vmatpush1.msra.mxu0 0.0
  %2208 = vmatprep.subr.mxu0 0.0
  %2209 = vmatpush1.msra.mxu0 0.0
  %2210 = vmatprep.subr.mxu0 0.0
  %2211 = vmatpush1.msra.mxu0 0.0
  %2212 = vmatprep.subr.mxu0 0.0
  %2213 = vmatpush1.msra.mxu0 0.0
  %2214 = vmatprep.subr.mxu0 0.0
  %2215 = vmatpush1.msra.mxu0 0.0
  %2216 = vmatprep.subr.mxu0 0.0
  %2217 = vmatpush1.msra.mxu0 0.0
  %2218 = vmatprep.subr.mxu0 0.0
  %2219 = vmatpush1.msra.mxu0 0.0
  %2220 = vmatprep.subr.mxu0 0.0
  %2221 = vmatpush1.msra.mxu0 0.0
  %2222 = vmatprep.subr.mxu0 0.0
  %2223 = vmatpush1.msra.mxu0 0.0
  %2224 = vmatprep.subr.mxu0 0.0
  %2225 = vmatpush1.msra.mxu0 0.0
  %2226 = vmatprep.subr.mxu0 0.0
  %2227 = vmatpush1.msra.mxu0 0.0
  %2228 = vmatprep.subr.mxu0 0.0
  %2229 = vmatpush1.msra.mxu0 0.0
  %2230 = vmatprep.subr.mxu0 0.0
  %2231 = vmatpush1.msra.mxu0 0.0
  %2232 = vmatprep.subr.mxu0 0.0
  %2233 = vmatpush1.msra.mxu0 0.0
  %2234 = vmatprep.subr.mxu0 0.0
  %2235 = vmatpush1.msra.mxu0 0.0
  %2236 = vmatprep.subr.mxu0 0.0
  %2237 = vmatpush1.msra.mxu0 0.0
  %2238 = vmatprep.subr.mxu0 0.0
  %2239 = vmatpush1.msra.mxu0 0.0
  %2240 = vmatprep.subr.mxu0 0.0
  %2241 = vmatpush1.msra.mxu0 0.0
  %2242 = vmatprep.subr.mxu0 0.0
  %2243 = vmatpush1.msra.mxu0 0.0
  %2244 = vmatprep.subr.mxu0 0.0
  %2245 = vmatpush1.msra.mxu0 0.0
  %2246 = vmatprep.subr.mxu0 0.0
  %2247 = vmatpush1.msra.mxu0 0.0
  %2248 = vmatprep.subr.mxu0 0.0
  %2249 = vmatpush1.msra.mxu0 0.0
  %2250 = vmatprep.subr.mxu0 0.0
  %2251 = vmatpush1.msra.mxu0 0.0
  %2252 = vmatprep.subr.mxu0 0.0
  %2253 = vmatpush1.msra.mxu0 0.0
  %2254 = vmatprep.subr.mxu0 0.0
  %2255 = vmatpush1.msra.mxu0 0.0
  %2256 = vmatprep.subr.mxu0 0.0
  %2257 = vmatpush1.msra.mxu0 0.0
  %2258 = vmatprep.subr.mxu0 0.0
  %2259 = vmatpush1.msra.mxu0 0.0
  %2260 = vmatprep.subr.mxu0 0.0
  %2261 = vmatpush1.msra.mxu0 0.0
  %2262 = vmatprep.mubr.f32.mxu0 0.0
  %2263 = vmatmul.mubr.f32.gmra.mrb[0].mxu0 %v2196
  %v2264 = vpop.f32.mrb[0].mxu0
  %v2265 = vadd.f32 0.0, %v2264
  %v2266 = vpop.f32.mrb[0].mxu0
  %v2267 = vadd.f32 0.0, %v2266
  %2268 = vdwg.mxu0
  %v2269 = vadd.f32 %v2183, %v2265
  %v2270 = vadd.f32 %v2184, %v2267
  %s2271 = scalar_lea.vmem %s4, 40
  %v2272 = vld [vmem:[%s2271] sm:$0xff]
  %2273 = vrot.lane.b32.xlu0 %v1849, 116
  %v2274 = vpop.permute.xlu0 %2273
  %2275 = vrot.lane.b32.xlu0 %v1850, 116
  %v2276 = vpop.permute.xlu0 %2275
  %vm2277 = vcmask 949248
  %v2278 = vsel %vm2277, %v2274, %v2276
  %v2282 = vsel %vm1864, %v2272, 0
  %2284 = vmatprep.subr.mxu0 %v2276
  %2285 = vmatpush1.msra.mxu0 %v2278
  %2286 = vmatprep.subr.mxu0 0.0
  %2287 = vmatpush1.msra.mxu0 0.0
  %2288 = vmatprep.subr.mxu0 0.0
  %2289 = vmatpush1.msra.mxu0 0.0
  %2290 = vmatprep.subr.mxu0 0.0
  %2291 = vmatpush1.msra.mxu0 0.0
  %2292 = vmatprep.subr.mxu0 0.0
  %2293 = vmatpush1.msra.mxu0 0.0
  %2294 = vmatprep.subr.mxu0 0.0
  %2295 = vmatpush1.msra.mxu0 0.0
  %2296 = vmatprep.subr.mxu0 0.0
  %2297 = vmatpush1.msra.mxu0 0.0
  %2298 = vmatprep.subr.mxu0 0.0
  %2299 = vmatpush1.msra.mxu0 0.0
  %2300 = vmatprep.subr.mxu0 0.0
  %2301 = vmatpush1.msra.mxu0 0.0
  %2302 = vmatprep.subr.mxu0 0.0
  %2303 = vmatpush1.msra.mxu0 0.0
  %2304 = vmatprep.subr.mxu0 0.0
  %2305 = vmatpush1.msra.mxu0 0.0
  %2306 = vmatprep.subr.mxu0 0.0
  %2307 = vmatpush1.msra.mxu0 0.0
  %2308 = vmatprep.subr.mxu0 0.0
  %2309 = vmatpush1.msra.mxu0 0.0
  %2310 = vmatprep.subr.mxu0 0.0
  %2311 = vmatpush1.msra.mxu0 0.0
  %2312 = vmatprep.subr.mxu0 0.0
  %2313 = vmatpush1.msra.mxu0 0.0
  %2314 = vmatprep.subr.mxu0 0.0
  %2315 = vmatpush1.msra.mxu0 0.0
  %2316 = vmatprep.subr.mxu0 0.0
  %2317 = vmatpush1.msra.mxu0 0.0
  %2318 = vmatprep.subr.mxu0 0.0
  %2319 = vmatpush1.msra.mxu0 0.0
  %2320 = vmatprep.subr.mxu0 0.0
  %2321 = vmatpush1.msra.mxu0 0.0
  %2322 = vmatprep.subr.mxu0 0.0
  %2323 = vmatpush1.msra.mxu0 0.0
  %2324 = vmatprep.subr.mxu0 0.0
  %2325 = vmatpush1.msra.mxu0 0.0
  %2326 = vmatprep.subr.mxu0 0.0
  %2327 = vmatpush1.msra.mxu0 0.0
  %2328 = vmatprep.subr.mxu0 0.0
  %2329 = vmatpush1.msra.mxu0 0.0
  %2330 = vmatprep.subr.mxu0 0.0
  %2331 = vmatpush1.msra.mxu0 0.0
  %2332 = vmatprep.subr.mxu0 0.0
  %2333 = vmatpush1.msra.mxu0 0.0
  %2334 = vmatprep.subr.mxu0 0.0
  %2335 = vmatpush1.msra.mxu0 0.0
  %2336 = vmatprep.subr.mxu0 0.0
  %2337 = vmatpush1.msra.mxu0 0.0
  %2338 = vmatprep.subr.mxu0 0.0
  %2339 = vmatpush1.msra.mxu0 0.0
  %2340 = vmatprep.subr.mxu0 0.0
  %2341 = vmatpush1.msra.mxu0 0.0
  %2342 = vmatprep.subr.mxu0 0.0
  %2343 = vmatpush1.msra.mxu0 0.0
  %2344 = vmatprep.subr.mxu0 0.0
  %2345 = vmatpush1.msra.mxu0 0.0
  %2346 = vmatprep.subr.mxu0 0.0
  %2347 = vmatpush1.msra.mxu0 0.0
  %2348 = vmatprep.mubr.f32.mxu0 0.0
  %2349 = vmatmul.mubr.f32.gmra.mrb[0].mxu0 %v2282
  %v2350 = vpop.f32.mrb[0].mxu0
  %v2351 = vadd.f32 0.0, %v2350
  %v2352 = vpop.f32.mrb[0].mxu0
  %v2353 = vadd.f32 0.0, %v2352
  %2354 = vdwg.mxu0
  %v2355 = vadd.f32 %v2269, %v2351
  %v2356 = vadd.f32 %v2270, %v2353
  %s2357 = scalar_lea.vmem %s4, 48
  %v2358 = vld [vmem:[%s2357] sm:$0xff]
  %2359 = vrot.lane.b32.xlu0 %v1849, 108
  %v2360 = vpop.permute.xlu0 %2359
  %2361 = vrot.lane.b32.xlu0 %v1850, 108
  %v2362 = vpop.permute.xlu0 %2361
  %vm2363 = vcmask 883712
  %v2364 = vsel %vm2363, %v2360, %v2362
  %v2368 = vsel %vm1864, %v2358, 0
  %2370 = vmatprep.subr.mxu0 %v2362
  %2371 = vmatpush1.msra.mxu0 %v2364
  %2372 = vmatprep.subr.mxu0 0.0
  %2373 = vmatpush1.msra.mxu0 0.0
  %2374 = vmatprep.subr.mxu0 0.0
  %2375 = vmatpush1.msra.mxu0 0.0
  %2376 = vmatprep.subr.mxu0 0.0
  %2377 = vmatpush1.msra.mxu0 0.0
  %2378 = vmatprep.subr.mxu0 0.0
  %2379 = vmatpush1.msra.mxu0 0.0
  %2380 = vmatprep.subr.mxu0 0.0
  %2381 = vmatpush1.msra.mxu0 0.0
  %2382 = vmatprep.subr.mxu0 0.0
  %2383 = vmatpush1.msra.mxu0 0.0
  %2384 = vmatprep.subr.mxu0 0.0
  %2385 = vmatpush1.msra.mxu0 0.0
  %2386 = vmatprep.subr.mxu0 0.0
  %2387 = vmatpush1.msra.mxu0 0.0
  %2388 = vmatprep.subr.mxu0 0.0
  %2389 = vmatpush1.msra.mxu0 0.0
  %2390 = vmatprep.subr.mxu0 0.0
  %2391 = vmatpush1.msra.mxu0 0.0
  %2392 = vmatprep.subr.mxu0 0.0
  %2393 = vmatpush1.msra.mxu0 0.0
  %2394 = vmatprep.subr.mxu0 0.0
  %2395 = vmatpush1.msra.mxu0 0.0
  %2396 = vmatprep.subr.mxu0 0.0
  %2397 = vmatpush1.msra.mxu0 0.0
  %2398 = vmatprep.subr.mxu0 0.0
  %2399 = vmatpush1.msra.mxu0 0.0
  %2400 = vmatprep.subr.mxu0 0.0
  %2401 = vmatpush1.msra.mxu0 0.0
  %2402 = vmatprep.subr.mxu0 0.0
  %2403 = vmatpush1.msra.mxu0 0.0
  %2404 = vmatprep.subr.mxu0 0.0
  %2405 = vmatpush1.msra.mxu0 0.0
  %2406 = vmatprep.subr.mxu0 0.0
  %2407 = vmatpush1.msra.mxu0 0.0
  %2408 = vmatprep.subr.mxu0 0.0
  %2409 = vmatpush1.msra.mxu0 0.0
  %2410 = vmatprep.subr.mxu0 0.0
  %2411 = vmatpush1.msra.mxu0 0.0
  %2412 = vmatprep.subr.mxu0 0.0
  %2413 = vmatpush1.msra.mxu0 0.0
  %2414 = vmatprep.subr.mxu0 0.0
  %2415 = vmatpush1.msra.mxu0 0.0
  %2416 = vmatprep.subr.mxu0 0.0
  %2417 = vmatpush1.msra.mxu0 0.0
  %2418 = vmatprep.subr.mxu0 0.0
  %2419 = vmatpush1.msra.mxu0 0.0
  %2420 = vmatprep.subr.mxu0 0.0
  %2421 = vmatpush1.msra.mxu0 0.0
  %2422 = vmatprep.subr.mxu0 0.0
  %2423 = vmatpush1.msra.mxu0 0.0
  %2424 = vmatprep.subr.mxu0 0.0
  %2425 = vmatpush1.msra.mxu0 0.0
  %2426 = vmatprep.subr.mxu0 0.0
  %2427 = vmatpush1.msra.mxu0 0.0
  %2428 = vmatprep.subr.mxu0 0.0
  %2429 = vmatpush1.msra.mxu0 0.0
  %2430 = vmatprep.subr.mxu0 0.0
  %2431 = vmatpush1.msra.mxu0 0.0
  %2432 = vmatprep.subr.mxu0 0.0
  %2433 = vmatpush1.msra.mxu0 0.0
  %2434 = vmatprep.mubr.f32.mxu0 0.0
  %2435 = vmatmul.mubr.f32.gmra.mrb[0].mxu0 %v2368
  %v2436 = vpop.f32.mrb[0].mxu0
  %v2437 = vadd.f32 0.0, %v2436
  %v2438 = vpop.f32.mrb[0].mxu0
  %v2439 = vadd.f32 0.0, %v2438
  %2440 = vdwg.mxu0
  %v2441 = vadd.f32 %v2355, %v2437
  %v2442 = vadd.f32 %v2356, %v2439
  %s2443 = scalar_lea.vmem %s4, 56
  %v2444 = vld [vmem:[%s2443] sm:$0xff]
  %2445 = vrot.lane.b32.xlu0 %v1849, 107
  %v2446 = vpop.permute.xlu0 %2445
  %2447 = vrot.lane.b32.xlu0 %v1850, 107
  %v2448 = vpop.permute.xlu0 %2447
  %vm2449 = vcmask 875520
  %v2450 = vsel %vm2449, %v2446, %v2448
  %v2454 = vsel %vm1864, %v2444, 0
  %2456 = vmatprep.subr.mxu0 %v2448
  %2457 = vmatpush1.msra.mxu0 %v2450
  %2458 = vmatprep.subr.mxu0 0.0
  %2459 = vmatpush1.msra.mxu0 0.0
  %2460 = vmatprep.subr.mxu0 0.0
  %2461 = vmatpush1.msra.mxu0 0.0
  %2462 = vmatprep.subr.mxu0 0.0
  %2463 = vmatpush1.msra.mxu0 0.0
  %2464 = vmatprep.subr.mxu0 0.0
  %2465 = vmatpush1.msra.mxu0 0.0
  %2466 = vmatprep.subr.mxu0 0.0
  %2467 = vmatpush1.msra.mxu0 0.0
  %2468 = vmatprep.subr.mxu0 0.0
  %2469 = vmatpush1.msra.mxu0 0.0
  %2470 = vmatprep.subr.mxu0 0.0
  %2471 = vmatpush1.msra.mxu0 0.0
  %2472 = vmatprep.subr.mxu0 0.0
  %2473 = vmatpush1.msra.mxu0 0.0
  %2474 = vmatprep.subr.mxu0 0.0
  %2475 = vmatpush1.msra.mxu0 0.0
  %2476 = vmatprep.subr.mxu0 0.0
  %2477 = vmatpush1.msra.mxu0 0.0
  %2478 = vmatprep.subr.mxu0 0.0
  %2479 = vmatpush1.msra.mxu0 0.0
  %2480 = vmatprep.subr.mxu0 0.0
  %2481 = vmatpush1.msra.mxu0 0.0
  %2482 = vmatprep.subr.mxu0 0.0
  %2483 = vmatpush1.msra.mxu0 0.0
  %2484 = vmatprep.subr.mxu0 0.0
  %2485 = vmatpush1.msra.mxu0 0.0
  %2486 = vmatprep.subr.mxu0 0.0
  %2487 = vmatpush1.msra.mxu0 0.0
  %2488 = vmatprep.subr.mxu0 0.0
  %2489 = vmatpush1.msra.mxu0 0.0
  %2490 = vmatprep.subr.mxu0 0.0
  %2491 = vmatpush1.msra.mxu0 0.0
  %2492 = vmatprep.subr.mxu0 0.0
  %2493 = vmatpush1.msra.mxu0 0.0
  %2494 = vmatprep.subr.mxu0 0.0
  %2495 = vmatpush1.msra.mxu0 0.0
  %2496 = vmatprep.subr.mxu0 0.0
  %2497 = vmatpush1.msra.mxu0 0.0
  %2498 = vmatprep.subr.mxu0 0.0
  %2499 = vmatpush1.msra.mxu0 0.0
  %2500 = vmatprep.subr.mxu0 0.0
  %2501 = vmatpush1.msra.mxu0 0.0
  %2502 = vmatprep.subr.mxu0 0.0
  %2503 = vmatpush1.msra.mxu0 0.0
  %2504 = vmatprep.subr.mxu0 0.0
  %2505 = vmatpush1.msra.mxu0 0.0
  %2506 = vmatprep.subr.mxu0 0.0
  %2507 = vmatpush1.msra.mxu0 0.0
  %2508 = vmatprep.subr.mxu0 0.0
  %2509 = vmatpush1.msra.mxu0 0.0
  %2510 = vmatprep.subr.mxu0 0.0
  %2511 = vmatpush1.msra.mxu0 0.0
  %2512 = vmatprep.subr.mxu0 0.0
  %2513 = vmatpush1.msra.mxu0 0.0
  %2514 = vmatprep.subr.mxu0 0.0
  %2515 = vmatpush1.msra.mxu0 0.0
  %2516 = vmatprep.subr.mxu0 0.0
  %2517 = vmatpush1.msra.mxu0 0.0
  %2518 = vmatprep.subr.mxu0 0.0
  %2519 = vmatpush1.msra.mxu0 0.0
  %2520 = vmatprep.mubr.f32.mxu0 0.0
  %2521 = vmatmul.mubr.f32.gmra.mrb[0].mxu0 %v2454
  %v2522 = vpop.f32.mrb[0].mxu0
  %v2523 = vadd.f32 0.0, %v2522
  %v2524 = vpop.f32.mrb[0].mxu0
  %v2525 = vadd.f32 0.0, %v2524
  %2526 = vdwg.mxu0
  %v2527 = vadd.f32 %v2441, %v2523
  %v2528 = vadd.f32 %v2442, %v2525
  %s2529 = scalar_lea.vmem %s4, 64
  %v2530 = vld [vmem:[%s2529] sm:$0xff]
  %2531 = vrot.lane.b32.xlu0 %v1849, 106
  %v2532 = vpop.permute.xlu0 %2531
  %2533 = vrot.lane.b32.xlu0 %v1850, 106
  %v2534 = vpop.permute.xlu0 %2533
  %vm2535 = vcmask 867328
  %v2536 = vsel %vm2535, %v2532, %v2534
  %v2540 = vsel %vm1864, %v2530, 0
  %2542 = vmatprep.subr.mxu0 %v2534
  %2543 = vmatpush1.msra.mxu0 %v2536
  %2544 = vmatprep.subr.mxu0 0.0
  %2545 = vmatpush1.msra.mxu0 0.0
  %2546 = vmatprep.subr.mxu0 0.0
  %2547 = vmatpush1.msra.mxu0 0.0
  %2548 = vmatprep.subr.mxu0 0.0
  %2549 = vmatpush1.msra.mxu0 0.0
  %2550 = vmatprep.subr.mxu0 0.0
  %2551 = vmatpush1.msra.mxu0 0.0
  %2552 = vmatprep.subr.mxu0 0.0
  %2553 = vmatpush1.msra.mxu0 0.0
  %2554 = vmatprep.subr.mxu0 0.0
  %2555 = vmatpush1.msra.mxu0 0.0
  %2556 = vmatprep.subr.mxu0 0.0
  %2557 = vmatpush1.msra.mxu0 0.0
  %2558 = vmatprep.subr.mxu0 0.0
  %2559 = vmatpush1.msra.mxu0 0.0
  %2560 = vmatprep.subr.mxu0 0.0
  %2561 = vmatpush1.msra.mxu0 0.0
  %2562 = vmatprep.subr.mxu0 0.0
  %2563 = vmatpush1.msra.mxu0 0.0
  %2564 = vmatprep.subr.mxu0 0.0
  %2565 = vmatpush1.msra.mxu0 0.0
  %2566 = vmatprep.subr.mxu0 0.0
  %2567 = vmatpush1.msra.mxu0 0.0
  %2568 = vmatprep.subr.mxu0 0.0
  %2569 = vmatpush1.msra.mxu0 0.0
  %2570 = vmatprep.subr.mxu0 0.0
  %2571 = vmatpush1.msra.mxu0 0.0
  %2572 = vmatprep.subr.mxu0 0.0
  %2573 = vmatpush1.msra.mxu0 0.0
  %2574 = vmatprep.subr.mxu0 0.0
  %2575 = vmatpush1.msra.mxu0 0.0
  %2576 = vmatprep.subr.mxu0 0.0
  %2577 = vmatpush1.msra.mxu0 0.0
  %2578 = vmatprep.subr.mxu0 0.0
  %2579 = vmatpush1.msra.mxu0 0.0
  %2580 = vmatprep.subr.mxu0 0.0
  %2581 = vmatpush1.msra.mxu0 0.0
  %2582 = vmatprep.subr.mxu0 0.0
  %2583 = vmatpush1.msra.mxu0 0.0
  %2584 = vmatprep.subr.mxu0 0.0
  %2585 = vmatpush1.msra.mxu0 0.0
  %2586 = vmatprep.subr.mxu0 0.0
  %2587 = vmatpush1.msra.mxu0 0.0
  %2588 = vmatprep.subr.mxu0 0.0
  %2589 = vmatpush1.msra.mxu0 0.0
  %2590 = vmatprep.subr.mxu0 0.0
  %2591 = vmatpush1.msra.mxu0 0.0
  %2592 = vmatprep.subr.mxu0 0.0
  %2593 = vmatpush1.msra.mxu0 0.0
  %2594 = vmatprep.subr.mxu0 0.0
  %2595 = vmatpush1.msra.mxu0 0.0
  %2596 = vmatprep.subr.mxu0 0.0
  %2597 = vmatpush1.msra.mxu0 0.0
  %2598 = vmatprep.subr.mxu0 0.0
  %2599 = vmatpush1.msra.mxu0 0.0
  %2600 = vmatprep.subr.mxu0 0.0
  %2601 = vmatpush1.msra.mxu0 0.0
  %2602 = vmatprep.subr.mxu0 0.0
  %2603 = vmatpush1.msra.mxu0 0.0
  %2604 = vmatprep.subr.mxu0 0.0
  %2605 = vmatpush1.msra.mxu0 0.0
  %2606 = vmatprep.mubr.f32.mxu0 0.0
  %2607 = vmatmul.mubr.f32.gmra.mrb[0].mxu0 %v2540
  %v2608 = vpop.f32.mrb[0].mxu0
  %v2609 = vadd.f32 0.0, %v2608
  %v2610 = vpop.f32.mrb[0].mxu0
  %v2611 = vadd.f32 0.0, %v2610
  %2612 = vdwg.mxu0
  %v2613 = vadd.f32 %v2527, %v2609
  %v2614 = vadd.f32 %v2528, %v2611
  %v2615 = vld [vmem:[%s5] sm:$0xff]
  %2617 = vset.pattern.permute.xlu0 0
  %2618 = vperm.xlu0 %2617, %v2615
  %v2619 = vpop.permute.xlu0 %2618
  %v2621 = vmul.f32 %v2613, %v2619
  %v2622 = vmul.f32 %v2614, %v2619
  %v2623 = vld [vmem:[%s6] sm:$0xff]
  %2625 = vset.pattern.permute.xlu0 0
  %2626 = vperm.xlu0 %2625, %v2623
  %v2627 = vpop.permute.xlu0 %2626
  %v2629 = vadd.f32 %v2621, %v2627
  %v2630 = vadd.f32 %v2622, %v2627
  %v2631 = vmax.f32 %v2629, 0.0
  %v2632 = vmax.f32 %v2630, 0.0
  %2633 = vst [vmem:[%s8] sm:$0xff] %v2631
  %vm2634 = vcmask 588800
  %2635 = vst.msk [vmem:[%s8 + $0x8] sm:$0xff] %vm2634, %v2632
  // Predicated region
  $region34: #{down_forward.1} parent=0 // pred_check
    _
  $region35: #{down_forward.1} parent=0 // pred_check_branch
    %2637 = sbr.rel (0) target = $region37
  $region36: #{down_forward.1} parent=0 // pred_region
    _
  $region37: #{down_forward.1} parent=0 // pred_fallthru
    _
  // Predicated region
  $region38: #{down_forward.1} parent=0 // pred_check
    _
  $region39: #{down_forward.1} parent=0 // pred_check_branch
    %2639 = sbr.rel (0) target = $region41
  $region40: #{down_forward.1} parent=0 // pred_region
    _
  $region41: #{down_forward.1} parent=0 // pred_fallthru
    _

</llo_original>
